<compile_context>
chip_gen: v5e
topology: v5e:2x2
jax: 0.10.0
libtpu: 0.0.40
codegen_flags: <defaults>
</compile_context>

<pallas_src>
import functools

import jax
import jax.numpy as jnp
import numpy as np
from jax.experimental import pallas as pl
from jax.experimental.pallas import tpu as pltpu


# ------------------------- host-side constant builders ----------------------

def _gather_matrix(n, h, w, stride):
    """0/1 matrix G of shape (9*M_out, M_in) for in-kernel im2col (layers 2-4).

    Row t*M_out + m holds a single 1 selecting the flattened (NHW) input row
    feeding tap t = ki*3 + kj of output position m (rows are all-zero where the
    tap falls into the zero padding).  pad=1, kernel=3x3.
    """
    oh = (h - 1) // stride + 1
    ow = (w - 1) // stride + 1
    m_in = n * h * w
    m_out = n * oh * ow
    g = np.zeros((9 * m_out, m_in), np.float32)
    for ki in range(3):
        for kj in range(3):
            t = ki * 3 + kj
            for b in range(n):
                for yo in range(oh):
                    yi = yo * stride + ki - 1
                    if yi < 0 or yi >= h:
                        continue
                    for xo in range(ow):
                        xi = xo * stride + kj - 1
                        if xi < 0 or xi >= w:
                            continue
                        m = (b * oh + yo) * ow + xo
                        p = (b * h + yi) * w + xi
                        g[t * m_out + m, p] = 1.0
    return g, (oh, ow)


def _im2col_conv1(x_nhwc, stride=2):
    """Wrapper-side im2col of the raw input for conv1 (layout plumbing only).

    Returns (N*OH*OW, 9*Cin) with columns ordered (ki, kj, ci) to match
    w1.reshape(9*Cin, Cout).
    """
    n, h, w, c = x_nhwc.shape
    oh = (h - 1) // stride + 1
    ow = (w - 1) // stride + 1
    xp = jnp.pad(x_nhwc, ((0, 0), (1, 1), (1, 1), (0, 0)))
    taps = []
    for ki in range(3):
        for kj in range(3):
            taps.append(xp[:, ki:ki + stride * (oh - 1) + 1:stride,
                            kj:kj + stride * (ow - 1) + 1:stride, :])
    cols = jnp.concatenate(taps, axis=-1).reshape(n * oh * ow, 9 * c)
    return cols.astype(jnp.float32), (oh, ow)


# ------------------------------ fused kernel --------------------------------

def _fused_kernel(cols1_ref, w1_ref, b1_ref,
                  g2_ref, w2_ref, b2_ref,
                  g3_ref, w3_ref, b3_ref,
                  g4_ref, w4_ref, b4_ref,
                  o_ref, *, max_val, scale):
    """Whole PostprocessNet forward; every intermediate stays on-chip."""

    # ---- conv1: wrapper-packed im2col -> one (M1, 9*Cin) @ (9*Cin, 16) matmul.
    w1 = w1_ref[...]
    x = jnp.dot(cols1_ref[...].astype(w1.dtype), w1,
                preferred_element_type=jnp.float32)
    x = jnp.maximum(x + b1_ref[...], 0.0)                     # (M1, 16) f32

    def conv_relu(x_f32, g_ref, w_ref, b_ref):
        g = g_ref[...]                        # (9*M, M_prev)  mm dtype (0/1)
        w = w_ref[...]                        # (9*C_prev, C)  mm dtype
        m = g.shape[0] // 9
        c_prev = w.shape[0] // 9
        c_out = w.shape[1]
        # in-kernel im2col: one MXU gather matmul builds the column buffer.
        cols = jnp.dot(g, x_f32.astype(g.dtype),
                       preferred_element_type=jnp.float32)     # (9*M, C_prev)
        cols = cols.astype(w.dtype)
        # per-tap accumulation: 9 matmuls with K = C_prev on the contraction.
        acc = jnp.zeros((m, c_out), jnp.float32)
        for t in range(9):
            acc = acc + jnp.dot(cols[t * m:(t + 1) * m, :],
                                w[t * c_prev:(t + 1) * c_prev, :],
                                preferred_element_type=jnp.float32)
        return jnp.maximum(acc + b_ref[...], 0.0)

    x = conv_relu(x, g2_ref, w2_ref, b2_ref)                   # (M2, 32)
    x = conv_relu(x, g3_ref, w3_ref, b3_ref)                   # (M3, 16)

    # ---- conv4 (Cout = 1): gather matmul + VPU multiply + lane reduce.
    # No MXU matmul with a 1-wide output.
    g4 = g4_ref[...]                                           # (9*M4, M3)
    w4 = w4_ref[...]                                           # (9*M4, C3) per-tap rows
    m4 = g4.shape[0] // 9
    a4 = jnp.dot(g4, x.astype(g4.dtype),
                 preferred_element_type=jnp.float32)           # (9*M4, C3)
    rows = jnp.sum(a4 * w4.astype(jnp.float32), axis=1,
                   keepdims=True)                              # (9*M4, 1)
    y = jnp.zeros((m4, 1), jnp.float32)
    for t in range(9):
        y = y + rows[t * m4:(t + 1) * m4, :]
    y = y + b4_ref[...]                                        # (1, 1) bcast

    # ---- SmoothStep epilogue: z = scale*y hoisted out of the loop (VALU
    # saving); sigmoids go to the EUP.
    z = scale * y
    out = jnp.zeros_like(z)
    for i in range(max_val):
        s = jax.nn.sigmoid(z - scale * (i + 0.5))
        out = out + (4.0 * (i + 1)) * s * (1.0 - s)
    o_ref[...] = out.astype(o_ref.dtype)


# --------------------------------- wrapper ----------------------------------

def postprocess_net(x_nhwc, params, *, max_val, scale, mm_dtype=jnp.bfloat16):
    """x_nhwc: (N, H, W, 4) f32 -> (N, H//8, W//8) f32 (== PyTorch squeeze(1))."""
    n, h, w, c_in = x_nhwc.shape

    # Layer 1: im2col in the wrapper (pure layout on the tiny raw input).
    cols1, (h_cur, w_cur) = _im2col_conv1(x_nhwc, stride=2)
    w1 = params["w1"].reshape(9 * c_in, -1).astype(mm_dtype)
    b1 = params["b1"].reshape(1, -1).astype(jnp.float32)
    operands = [cols1, w1, b1]

    # Layers 2-4: small gather-matrix constants for in-kernel im2col.
    layer_cfg = [("w2", "b2", 2, False), ("w3", "b3", 1, False),
                 ("w4", "b4", 2, True)]
    for wn, bn, stride, is_last in layer_cfg:
        w_hwio = params[wn]
        bias = params[bn]
        _, _, ci, co = w_hwio.shape
        g_np, (oh, ow) = _gather_matrix(n, h_cur, w_cur, stride)
        g = jnp.asarray(g_np, mm_dtype)                  # 0/1: exact in bf16
        if not is_last:
            w2d = w_hwio.reshape(9 * ci, co).astype(mm_dtype)   # per-tap stacked
            b2d = bias.reshape(1, co).astype(jnp.float32)
        else:
            # conv4: expand per-tap weight rows to match the (9*M4, C3) gather
            # output so the kernel can do a pure VPU multiply-reduce.
            m_out = n * oh * ow
            w_taps = w_hwio.reshape(9, ci)                      # Cout == 1
            w2d = jnp.repeat(w_taps, m_out, axis=0).astype(mm_dtype)
            b2d = bias.reshape(1, 1).astype(jnp.float32)
        operands += [g, w2d, b2d]
        h_cur, w_cur = oh, ow

    m_final = n * h_cur * w_cur
    kernel = functools.partial(_fused_kernel, max_val=max_val, scale=float(scale))
    out = pl.pallas_call(
        kernel,
        out_shape=jax.ShapeDtypeStruct((m_final, 1), jnp.float32),
        grid=(1,),
        in_specs=[pl.BlockSpec(op.shape, lambda i: (0, 0)) for op in operands],
        out_specs=pl.BlockSpec((m_final, 1), lambda i: (0, 0)),
        compiler_params=pltpu.CompilerParams(
            dimension_semantics=("arbitrary",)),
    )(*operands)
    return out.reshape(n, h_cur, w_cur)


# ------------------------------- reference ----------------------------------

def _reference(x_nhwc, params, max_val, scale):
    def conv(x, w, b, stride):
        y = jax.lax.conv_general_dilated(
            x, w, window_strides=(stride, stride), padding=((1, 1), (1, 1)),
            dimension_numbers=("NHWC", "HWIO", "NHWC"))
        return y + b
    x = jax.nn.relu(conv(x_nhwc, params["w1"], params["b1"], 2))
    x = jax.nn.relu(conv(x, params["w2"], params["b2"], 2))
    x = jax.nn.relu(conv(x, params["w3"], params["b3"], 1))
    y = conv(x, params["w4"], params["b4"], 2)
    out = jnp.zeros_like(y)
    for i in range(max_val):
        s = jax.nn.sigmoid(scale * (y - (i + 0.5)))
        out = out + 4.0 * (i + 1) * s * (1.0 - s)
    return out[..., 0]


# --------------------------------- main --------------------------------------

def _init_params(key):
    # Deterministic synthetic init; weights stored HWIO (= PyTorch OIHW transposed).
    shapes = {
        "w1": (3, 3, 4, 16), "b1": (16,),
        "w2": (3, 3, 16, 32), "b2": (32,),
        "w3": (3, 3, 32, 16), "b3": (16,),
        "w4": (3, 3, 16, 1), "b4": (1,),
    }
    params = {}
    keys = jax.random.split(key, len(shapes))
    for k, (name, shp) in zip(keys, sorted(shapes.items())):
        fan_in = int(np.prod(shp[:-1])) if len(shp) == 4 else 16
        params[name] = (jax.random.normal(k, shp, jnp.float32)
                        / jnp.sqrt(jnp.float32(max(fan_in, 1))))
    return params


if __name__ == "__main__":
    MAX_VAL, SCALE = 3, 10.0
    key = jax.random.PRNGKey(0)
    kx, kp = jax.random.split(key)

    # PyTorch-style NCHW input, small shape: (batch=2, C=4, H=16, W=16).
    x_nchw = jax.random.normal(kx, (2, 4, 16, 16), jnp.float32)
    x_nhwc = jnp.transpose(x_nchw, (0, 2, 3, 1))
    params = _init_params(kp)

    ref = _reference(x_nhwc, params, MAX_VAL, SCALE)

    # f32 MXU path: tight correctness check.
    out_f32 = postprocess_net(x_nhwc, params, max_val=MAX_VAL, scale=SCALE,
                              mm_dtype=jnp.float32)
    out_f32 = jax.block_until_ready(out_f32)
    assert out_f32.shape == (2, 2, 2), out_f32.shape
    np.testing.assert_allclose(np.asarray(out_f32), np.asarray(ref),
                               atol=1e-4, rtol=1e-4)

    # bf16 MXU path (default; v6e/v7x-friendly): loose sanity check only,
    # since the sharp SmoothStep (scale=10) amplifies bf16 rounding.
    out_bf16 = postprocess_net(x_nhwc, params, max_val=MAX_VAL, scale=SCALE,
                               mm_dtype=jnp.bfloat16)
    out_bf16 = jax.block_until_ready(out_bf16)
    assert out_bf16.shape == (2, 2, 2), out_bf16.shape
    np.testing.assert_allclose(np.asarray(out_bf16), np.asarray(ref),
                               atol=0.5, rtol=0.0)

    print("KERNEL_OK")
</pallas_src>

<mosaic_0001>
module attributes {stable_mosaic.version = 11 : i64} {
  func.func @_fused_kernel(%arg0: i32, %arg1: memref<128x36xf32, #tpu.memory_space<vmem>>, %arg2: memref<36x16xf32, #tpu.memory_space<vmem>>, %arg3: memref<1x16xf32, #tpu.memory_space<vmem>>, %arg4: memref<288x128xf32, #tpu.memory_space<vmem>>, %arg5: memref<144x32xf32, #tpu.memory_space<vmem>>, %arg6: memref<1x32xf32, #tpu.memory_space<vmem>>, %arg7: memref<288x32xf32, #tpu.memory_space<vmem>>, %arg8: memref<288x16xf32, #tpu.memory_space<vmem>>, %arg9: memref<1x16xf32, #tpu.memory_space<vmem>>, %arg10: memref<72x32xf32, #tpu.memory_space<vmem>>, %arg11: memref<72x16xf32, #tpu.memory_space<vmem>>, %arg12: memref<1x1xf32, #tpu.memory_space<vmem>>, %arg13: memref<8x1xf32, #tpu.memory_space<vmem>>) attributes {dimension_semantics = [#tpu.dimension_semantics<arbitrary>], iteration_bounds = array<i64: 1>, scalar_prefetch = 0 : i64, scratch_operands = 0 : i64, tpu.core_type = #tpu.core_type<tc>, window_params = [{pipeline_mode = #tpu.pipeline_mode<synchronous>, transform_indices = @transform_0, window_bounds = array<i64: 128, 36>}, {pipeline_mode = #tpu.pipeline_mode<synchronous>, transform_indices = @transform_1, window_bounds = array<i64: 36, 16>}, {pipeline_mode = #tpu.pipeline_mode<synchronous>, transform_indices = @transform_2, window_bounds = array<i64: 1, 16>}, {pipeline_mode = #tpu.pipeline_mode<synchronous>, transform_indices = @transform_3, window_bounds = array<i64: 288, 128>}, {pipeline_mode = #tpu.pipeline_mode<synchronous>, transform_indices = @transform_4, window_bounds = array<i64: 144, 32>}, {pipeline_mode = #tpu.pipeline_mode<synchronous>, transform_indices = @transform_5, window_bounds = array<i64: 1, 32>}, {pipeline_mode = #tpu.pipeline_mode<synchronous>, transform_indices = @transform_6, window_bounds = array<i64: 288, 32>}, {pipeline_mode = #tpu.pipeline_mode<synchronous>, transform_indices = @transform_7, window_bounds = array<i64: 288, 16>}, {pipeline_mode = #tpu.pipeline_mode<synchronous>, transform_indices = @transform_8, window_bounds = array<i64: 1, 16>}, {pipeline_mode = #tpu.pipeline_mode<synchronous>, transform_indices = @transform_9, window_bounds = array<i64: 72, 32>}, {pipeline_mode = #tpu.pipeline_mode<synchronous>, transform_indices = @transform_10, window_bounds = array<i64: 72, 16>}, {pipeline_mode = #tpu.pipeline_mode<synchronous>, transform_indices = @transform_11, window_bounds = array<i64: 1, 1>}, {pipeline_mode = #tpu.pipeline_mode<synchronous>, transform_indices = @transform_12, window_bounds = array<i64: 8, 1>}]} {
    %c0 = arith.constant 0 : index
    %c0_0 = arith.constant 0 : index
    %0 = vector.load %arg2[%c0, %c0_0] : memref<36x16xf32, #tpu.memory_space<vmem>>, vector<36x16xf32>
    %c0_1 = arith.constant 0 : index
    %c0_2 = arith.constant 0 : index
    %1 = vector.load %arg1[%c0_1, %c0_2] : memref<128x36xf32, #tpu.memory_space<vmem>>, vector<128x36xf32>
    %cst = arith.constant dense<0.000000e+00> : vector<128x16xf32>
    %2 = tpu.matmul %1, %0, %cst {dimension_numbers = #tpu.dot_dimension_numbers<[1], [0], [0], [1], [0, 0, 1, 1], [], []>} : vector<128x36xf32>, vector<36x16xf32>, vector<128x16xf32> -> vector<128x16xf32>
    %c0_3 = arith.constant 0 : index
    %c0_4 = arith.constant 0 : index
    %3 = vector.load %arg3[%c0_3, %c0_4] : memref<1x16xf32, #tpu.memory_space<vmem>>, vector<1x16xf32>
    %4 = vector.broadcast %3 : vector<1x16xf32> to vector<128x16xf32>
    %5 = arith.addf %2, %4 : vector<128x16xf32>
    %cst_5 = arith.constant 0.000000e+00 : f32
    %6 = vector.broadcast %cst_5 : f32 to vector<128x16xf32>
    %7 = arith.maximumf %5, %6 : vector<128x16xf32>
    %c0_6 = arith.constant 0 : index
    %c0_7 = arith.constant 0 : index
    %8 = vector.load %arg4[%c0_6, %c0_7] : memref<288x128xf32, #tpu.memory_space<vmem>>, vector<288x128xf32>
    %c0_8 = arith.constant 0 : index
    %c0_9 = arith.constant 0 : index
    %9 = vector.load %arg5[%c0_8, %c0_9] : memref<144x32xf32, #tpu.memory_space<vmem>>, vector<144x32xf32>
    %cst_10 = arith.constant dense<0.000000e+00> : vector<288x16xf32>
    %10 = tpu.matmul %8, %7, %cst_10 {dimension_numbers = #tpu.dot_dimension_numbers<[1], [0], [0], [1], [0, 0, 1, 1], [], []>} : vector<288x128xf32>, vector<128x16xf32>, vector<288x16xf32> -> vector<288x16xf32>
    %cst_11 = arith.constant 0.000000e+00 : f32
    %11 = vector.broadcast %cst_11 : f32 to vector<32x32xf32>
    %12 = vector.extract_strided_slice %10 {offsets = [0, 0], sizes = [32, 16], strides = [1, 1]} : vector<288x16xf32> to vector<32x16xf32>
    %13 = vector.extract_strided_slice %9 {offsets = [0, 0], sizes = [16, 32], strides = [1, 1]} : vector<144x32xf32> to vector<16x32xf32>
    %cst_12 = arith.constant dense<0.000000e+00> : vector<32x32xf32>
    %14 = tpu.matmul %12, %13, %cst_12 {dimension_numbers = #tpu.dot_dimension_numbers<[1], [0], [0], [1], [0, 0, 1, 1], [], []>} : vector<32x16xf32>, vector<16x32xf32>, vector<32x32xf32> -> vector<32x32xf32>
    %15 = arith.addf %11, %14 : vector<32x32xf32>
    %16 = vector.extract_strided_slice %10 {offsets = [32, 0], sizes = [32, 16], strides = [1, 1]} : vector<288x16xf32> to vector<32x16xf32>
    %17 = vector.extract_strided_slice %9 {offsets = [16, 0], sizes = [16, 32], strides = [1, 1]} : vector<144x32xf32> to vector<16x32xf32>
    %cst_13 = arith.constant dense<0.000000e+00> : vector<32x32xf32>
    %18 = tpu.matmul %16, %17, %cst_13 {dimension_numbers = #tpu.dot_dimension_numbers<[1], [0], [0], [1], [0, 0, 1, 1], [], []>} : vector<32x16xf32>, vector<16x32xf32>, vector<32x32xf32> -> vector<32x32xf32>
    %19 = arith.addf %15, %18 : vector<32x32xf32>
    %20 = vector.extract_strided_slice %10 {offsets = [64, 0], sizes = [32, 16], strides = [1, 1]} : vector<288x16xf32> to vector<32x16xf32>
    %21 = vector.extract_strided_slice %9 {offsets = [32, 0], sizes = [16, 32], strides = [1, 1]} : vector<144x32xf32> to vector<16x32xf32>
    %cst_14 = arith.constant dense<0.000000e+00> : vector<32x32xf32>
    %22 = tpu.matmul %20, %21, %cst_14 {dimension_numbers = #tpu.dot_dimension_numbers<[1], [0], [0], [1], [0, 0, 1, 1], [], []>} : vector<32x16xf32>, vector<16x32xf32>, vector<32x32xf32> -> vector<32x32xf32>
    %23 = arith.addf %19, %22 : vector<32x32xf32>
    %24 = vector.extract_strided_slice %10 {offsets = [96, 0], sizes = [32, 16], strides = [1, 1]} : vector<288x16xf32> to vector<32x16xf32>
    %25 = vector.extract_strided_slice %9 {offsets = [48, 0], sizes = [16, 32], strides = [1, 1]} : vector<144x32xf32> to vector<16x32xf32>
    %cst_15 = arith.constant dense<0.000000e+00> : vector<32x32xf32>
    %26 = tpu.matmul %24, %25, %cst_15 {dimension_numbers = #tpu.dot_dimension_numbers<[1], [0], [0], [1], [0, 0, 1, 1], [], []>} : vector<32x16xf32>, vector<16x32xf32>, vector<32x32xf32> -> vector<32x32xf32>
    %27 = arith.addf %23, %26 : vector<32x32xf32>
    %28 = vector.extract_strided_slice %10 {offsets = [128, 0], sizes = [32, 16], strides = [1, 1]} : vector<288x16xf32> to vector<32x16xf32>
    %29 = vector.extract_strided_slice %9 {offsets = [64, 0], sizes = [16, 32], strides = [1, 1]} : vector<144x32xf32> to vector<16x32xf32>
    %cst_16 = arith.constant dense<0.000000e+00> : vector<32x32xf32>
    %30 = tpu.matmul %28, %29, %cst_16 {dimension_numbers = #tpu.dot_dimension_numbers<[1], [0], [0], [1], [0, 0, 1, 1], [], []>} : vector<32x16xf32>, vector<16x32xf32>, vector<32x32xf32> -> vector<32x32xf32>
    %31 = arith.addf %27, %30 : vector<32x32xf32>
    %32 = vector.extract_strided_slice %10 {offsets = [160, 0], sizes = [32, 16], strides = [1, 1]} : vector<288x16xf32> to vector<32x16xf32>
    %33 = vector.extract_strided_slice %9 {offsets = [80, 0], sizes = [16, 32], strides = [1, 1]} : vector<144x32xf32> to vector<16x32xf32>
    %cst_17 = arith.constant dense<0.000000e+00> : vector<32x32xf32>
    %34 = tpu.matmul %32, %33, %cst_17 {dimension_numbers = #tpu.dot_dimension_numbers<[1], [0], [0], [1], [0, 0, 1, 1], [], []>} : vector<32x16xf32>, vector<16x32xf32>, vector<32x32xf32> -> vector<32x32xf32>
    %35 = arith.addf %31, %34 : vector<32x32xf32>
    %36 = vector.extract_strided_slice %10 {offsets = [192, 0], sizes = [32, 16], strides = [1, 1]} : vector<288x16xf32> to vector<32x16xf32>
    %37 = vector.extract_strided_slice %9 {offsets = [96, 0], sizes = [16, 32], strides = [1, 1]} : vector<144x32xf32> to vector<16x32xf32>
    %cst_18 = arith.constant dense<0.000000e+00> : vector<32x32xf32>
    %38 = tpu.matmul %36, %37, %cst_18 {dimension_numbers = #tpu.dot_dimension_numbers<[1], [0], [0], [1], [0, 0, 1, 1], [], []>} : vector<32x16xf32>, vector<16x32xf32>, vector<32x32xf32> -> vector<32x32xf32>
    %39 = arith.addf %35, %38 : vector<32x32xf32>
    %40 = vector.extract_strided_slice %10 {offsets = [224, 0], sizes = [32, 16], strides = [1, 1]} : vector<288x16xf32> to vector<32x16xf32>
    %41 = vector.extract_strided_slice %9 {offsets = [112, 0], sizes = [16, 32], strides = [1, 1]} : vector<144x32xf32> to vector<16x32xf32>
    %cst_19 = arith.constant dense<0.000000e+00> : vector<32x32xf32>
    %42 = tpu.matmul %40, %41, %cst_19 {dimension_numbers = #tpu.dot_dimension_numbers<[1], [0], [0], [1], [0, 0, 1, 1], [], []>} : vector<32x16xf32>, vector<16x32xf32>, vector<32x32xf32> -> vector<32x32xf32>
    %43 = arith.addf %39, %42 : vector<32x32xf32>
    %44 = vector.extract_strided_slice %10 {offsets = [256, 0], sizes = [32, 16], strides = [1, 1]} : vector<288x16xf32> to vector<32x16xf32>
    %45 = vector.extract_strided_slice %9 {offsets = [128, 0], sizes = [16, 32], strides = [1, 1]} : vector<144x32xf32> to vector<16x32xf32>
    %cst_20 = arith.constant dense<0.000000e+00> : vector<32x32xf32>
    %46 = tpu.matmul %44, %45, %cst_20 {dimension_numbers = #tpu.dot_dimension_numbers<[1], [0], [0], [1], [0, 0, 1, 1], [], []>} : vector<32x16xf32>, vector<16x32xf32>, vector<32x32xf32> -> vector<32x32xf32>
    %47 = arith.addf %43, %46 : vector<32x32xf32>
    %c0_21 = arith.constant 0 : index
    %c0_22 = arith.constant 0 : index
    %48 = vector.load %arg6[%c0_21, %c0_22] : memref<1x32xf32, #tpu.memory_space<vmem>>, vector<1x32xf32>
    %49 = vector.broadcast %48 : vector<1x32xf32> to vector<32x32xf32>
    %50 = arith.addf %47, %49 : vector<32x32xf32>
    %cst_23 = arith.constant 0.000000e+00 : f32
    %51 = vector.broadcast %cst_23 : f32 to vector<32x32xf32>
    %52 = arith.maximumf %50, %51 : vector<32x32xf32>
    %c0_24 = arith.constant 0 : index
    %c0_25 = arith.constant 0 : index
    %53 = vector.load %arg7[%c0_24, %c0_25] : memref<288x32xf32, #tpu.memory_space<vmem>>, vector<288x32xf32>
    %c0_26 = arith.constant 0 : index
    %c0_27 = arith.constant 0 : index
    %54 = vector.load %arg8[%c0_26, %c0_27] : memref<288x16xf32, #tpu.memory_space<vmem>>, vector<288x16xf32>
    %cst_28 = arith.constant dense<0.000000e+00> : vector<288x32xf32>
    %55 = tpu.matmul %53, %52, %cst_28 {dimension_numbers = #tpu.dot_dimension_numbers<[1], [0], [0], [1], [0, 0, 1, 1], [], []>} : vector<288x32xf32>, vector<32x32xf32>, vector<288x32xf32> -> vector<288x32xf32>
    %cst_29 = arith.constant 0.000000e+00 : f32
    %56 = vector.broadcast %cst_29 : f32 to vector<32x16xf32>
    %57 = vector.extract_strided_slice %55 {offsets = [0, 0], sizes = [32, 32], strides = [1, 1]} : vector<288x32xf32> to vector<32x32xf32>
    %58 = vector.extract_strided_slice %54 {offsets = [0, 0], sizes = [32, 16], strides = [1, 1]} : vector<288x16xf32> to vector<32x16xf32>
    %cst_30 = arith.constant dense<0.000000e+00> : vector<32x16xf32>
    %59 = tpu.matmul %57, %58, %cst_30 {dimension_numbers = #tpu.dot_dimension_numbers<[1], [0], [0], [1], [0, 0, 1, 1], [], []>} : vector<32x32xf32>, vector<32x16xf32>, vector<32x16xf32> -> vector<32x16xf32>
    %60 = arith.addf %56, %59 : vector<32x16xf32>
    %61 = vector.extract_strided_slice %55 {offsets = [32, 0], sizes = [32, 32], strides = [1, 1]} : vector<288x32xf32> to vector<32x32xf32>
    %62 = vector.extract_strided_slice %54 {offsets = [32, 0], sizes = [32, 16], strides = [1, 1]} : vector<288x16xf32> to vector<32x16xf32>
    %cst_31 = arith.constant dense<0.000000e+00> : vector<32x16xf32>
    %63 = tpu.matmul %61, %62, %cst_31 {dimension_numbers = #tpu.dot_dimension_numbers<[1], [0], [0], [1], [0, 0, 1, 1], [], []>} : vector<32x32xf32>, vector<32x16xf32>, vector<32x16xf32> -> vector<32x16xf32>
    %64 = arith.addf %60, %63 : vector<32x16xf32>
    %65 = vector.extract_strided_slice %55 {offsets = [64, 0], sizes = [32, 32], strides = [1, 1]} : vector<288x32xf32> to vector<32x32xf32>
    %66 = vector.extract_strided_slice %54 {offsets = [64, 0], sizes = [32, 16], strides = [1, 1]} : vector<288x16xf32> to vector<32x16xf32>
    %cst_32 = arith.constant dense<0.000000e+00> : vector<32x16xf32>
    %67 = tpu.matmul %65, %66, %cst_32 {dimension_numbers = #tpu.dot_dimension_numbers<[1], [0], [0], [1], [0, 0, 1, 1], [], []>} : vector<32x32xf32>, vector<32x16xf32>, vector<32x16xf32> -> vector<32x16xf32>
    %68 = arith.addf %64, %67 : vector<32x16xf32>
    %69 = vector.extract_strided_slice %55 {offsets = [96, 0], sizes = [32, 32], strides = [1, 1]} : vector<288x32xf32> to vector<32x32xf32>
    %70 = vector.extract_strided_slice %54 {offsets = [96, 0], sizes = [32, 16], strides = [1, 1]} : vector<288x16xf32> to vector<32x16xf32>
    %cst_33 = arith.constant dense<0.000000e+00> : vector<32x16xf32>
    %71 = tpu.matmul %69, %70, %cst_33 {dimension_numbers = #tpu.dot_dimension_numbers<[1], [0], [0], [1], [0, 0, 1, 1], [], []>} : vector<32x32xf32>, vector<32x16xf32>, vector<32x16xf32> -> vector<32x16xf32>
    %72 = arith.addf %68, %71 : vector<32x16xf32>
    %73 = vector.extract_strided_slice %55 {offsets = [128, 0], sizes = [32, 32], strides = [1, 1]} : vector<288x32xf32> to vector<32x32xf32>
    %74 = vector.extract_strided_slice %54 {offsets = [128, 0], sizes = [32, 16], strides = [1, 1]} : vector<288x16xf32> to vector<32x16xf32>
    %cst_34 = arith.constant dense<0.000000e+00> : vector<32x16xf32>
    %75 = tpu.matmul %73, %74, %cst_34 {dimension_numbers = #tpu.dot_dimension_numbers<[1], [0], [0], [1], [0, 0, 1, 1], [], []>} : vector<32x32xf32>, vector<32x16xf32>, vector<32x16xf32> -> vector<32x16xf32>
    %76 = arith.addf %72, %75 : vector<32x16xf32>
    %77 = vector.extract_strided_slice %55 {offsets = [160, 0], sizes = [32, 32], strides = [1, 1]} : vector<288x32xf32> to vector<32x32xf32>
    %78 = vector.extract_strided_slice %54 {offsets = [160, 0], sizes = [32, 16], strides = [1, 1]} : vector<288x16xf32> to vector<32x16xf32>
    %cst_35 = arith.constant dense<0.000000e+00> : vector<32x16xf32>
    %79 = tpu.matmul %77, %78, %cst_35 {dimension_numbers = #tpu.dot_dimension_numbers<[1], [0], [0], [1], [0, 0, 1, 1], [], []>} : vector<32x32xf32>, vector<32x16xf32>, vector<32x16xf32> -> vector<32x16xf32>
    %80 = arith.addf %76, %79 : vector<32x16xf32>
    %81 = vector.extract_strided_slice %55 {offsets = [192, 0], sizes = [32, 32], strides = [1, 1]} : vector<288x32xf32> to vector<32x32xf32>
    %82 = vector.extract_strided_slice %54 {offsets = [192, 0], sizes = [32, 16], strides = [1, 1]} : vector<288x16xf32> to vector<32x16xf32>
    %cst_36 = arith.constant dense<0.000000e+00> : vector<32x16xf32>
    %83 = tpu.matmul %81, %82, %cst_36 {dimension_numbers = #tpu.dot_dimension_numbers<[1], [0], [0], [1], [0, 0, 1, 1], [], []>} : vector<32x32xf32>, vector<32x16xf32>, vector<32x16xf32> -> vector<32x16xf32>
    %84 = arith.addf %80, %83 : vector<32x16xf32>
    %85 = vector.extract_strided_slice %55 {offsets = [224, 0], sizes = [32, 32], strides = [1, 1]} : vector<288x32xf32> to vector<32x32xf32>
    %86 = vector.extract_strided_slice %54 {offsets = [224, 0], sizes = [32, 16], strides = [1, 1]} : vector<288x16xf32> to vector<32x16xf32>
    %cst_37 = arith.constant dense<0.000000e+00> : vector<32x16xf32>
    %87 = tpu.matmul %85, %86, %cst_37 {dimension_numbers = #tpu.dot_dimension_numbers<[1], [0], [0], [1], [0, 0, 1, 1], [], []>} : vector<32x32xf32>, vector<32x16xf32>, vector<32x16xf32> -> vector<32x16xf32>
    %88 = arith.addf %84, %87 : vector<32x16xf32>
    %89 = vector.extract_strided_slice %55 {offsets = [256, 0], sizes = [32, 32], strides = [1, 1]} : vector<288x32xf32> to vector<32x32xf32>
    %90 = vector.extract_strided_slice %54 {offsets = [256, 0], sizes = [32, 16], strides = [1, 1]} : vector<288x16xf32> to vector<32x16xf32>
    %cst_38 = arith.constant dense<0.000000e+00> : vector<32x16xf32>
    %91 = tpu.matmul %89, %90, %cst_38 {dimension_numbers = #tpu.dot_dimension_numbers<[1], [0], [0], [1], [0, 0, 1, 1], [], []>} : vector<32x32xf32>, vector<32x16xf32>, vector<32x16xf32> -> vector<32x16xf32>
    %92 = arith.addf %88, %91 : vector<32x16xf32>
    %c0_39 = arith.constant 0 : index
    %c0_40 = arith.constant 0 : index
    %93 = vector.load %arg9[%c0_39, %c0_40] : memref<1x16xf32, #tpu.memory_space<vmem>>, vector<1x16xf32>
    %94 = vector.broadcast %93 : vector<1x16xf32> to vector<32x16xf32>
    %95 = arith.addf %92, %94 : vector<32x16xf32>
    %cst_41 = arith.constant 0.000000e+00 : f32
    %96 = vector.broadcast %cst_41 : f32 to vector<32x16xf32>
    %97 = arith.maximumf %95, %96 : vector<32x16xf32>
    %c0_42 = arith.constant 0 : index
    %c0_43 = arith.constant 0 : index
    %98 = vector.load %arg10[%c0_42, %c0_43] : memref<72x32xf32, #tpu.memory_space<vmem>>, vector<72x32xf32>
    %c0_44 = arith.constant 0 : index
    %c0_45 = arith.constant 0 : index
    %99 = vector.load %arg11[%c0_44, %c0_45] : memref<72x16xf32, #tpu.memory_space<vmem>>, vector<72x16xf32>
    %cst_46 = arith.constant dense<0.000000e+00> : vector<72x16xf32>
    %100 = tpu.matmul %98, %97, %cst_46 {dimension_numbers = #tpu.dot_dimension_numbers<[1], [0], [0], [1], [0, 0, 1, 1], [], []>} : vector<72x32xf32>, vector<32x16xf32>, vector<72x16xf32> -> vector<72x16xf32>
    %101 = arith.mulf %100, %99 : vector<72x16xf32>
    %cst_47 = arith.constant dense<0.000000e+00> : vector<72xf32>
    %102 = vector.multi_reduction <add>, %101, %cst_47 [1] : vector<72x16xf32> to vector<72xf32>
    %103 = vector.shape_cast %102 : vector<72xf32> to vector<72x1xf32>
    %cst_48 = arith.constant 0.000000e+00 : f32
    %104 = vector.broadcast %cst_48 : f32 to vector<8x1xf32>
    %105 = vector.extract_strided_slice %103 {offsets = [0, 0], sizes = [8, 1], strides = [1, 1]} : vector<72x1xf32> to vector<8x1xf32>
    %106 = arith.addf %104, %105 : vector<8x1xf32>
    %107 = vector.extract_strided_slice %103 {offsets = [8, 0], sizes = [8, 1], strides = [1, 1]} : vector<72x1xf32> to vector<8x1xf32>
    %108 = arith.addf %106, %107 : vector<8x1xf32>
    %109 = vector.extract_strided_slice %103 {offsets = [16, 0], sizes = [8, 1], strides = [1, 1]} : vector<72x1xf32> to vector<8x1xf32>
    %110 = arith.addf %108, %109 : vector<8x1xf32>
    %111 = vector.extract_strided_slice %103 {offsets = [24, 0], sizes = [8, 1], strides = [1, 1]} : vector<72x1xf32> to vector<8x1xf32>
    %112 = arith.addf %110, %111 : vector<8x1xf32>
    %113 = vector.extract_strided_slice %103 {offsets = [32, 0], sizes = [8, 1], strides = [1, 1]} : vector<72x1xf32> to vector<8x1xf32>
    %114 = arith.addf %112, %113 : vector<8x1xf32>
    %115 = vector.extract_strided_slice %103 {offsets = [40, 0], sizes = [8, 1], strides = [1, 1]} : vector<72x1xf32> to vector<8x1xf32>
    %116 = arith.addf %114, %115 : vector<8x1xf32>
    %117 = vector.extract_strided_slice %103 {offsets = [48, 0], sizes = [8, 1], strides = [1, 1]} : vector<72x1xf32> to vector<8x1xf32>
    %118 = arith.addf %116, %117 : vector<8x1xf32>
    %119 = vector.extract_strided_slice %103 {offsets = [56, 0], sizes = [8, 1], strides = [1, 1]} : vector<72x1xf32> to vector<8x1xf32>
    %120 = arith.addf %118, %119 : vector<8x1xf32>
    %121 = vector.extract_strided_slice %103 {offsets = [64, 0], sizes = [8, 1], strides = [1, 1]} : vector<72x1xf32> to vector<8x1xf32>
    %122 = arith.addf %120, %121 : vector<8x1xf32>
    %c0_49 = arith.constant 0 : index
    %c0_50 = arith.constant 0 : index
    %123 = vector.load %arg12[%c0_49, %c0_50] : memref<1x1xf32, #tpu.memory_space<vmem>>, vector<1x1xf32>
    %124 = vector.broadcast %123 : vector<1x1xf32> to vector<8x1xf32>
    %125 = arith.addf %122, %124 : vector<8x1xf32>
    %cst_51 = arith.constant 1.000000e+01 : f32
    %126 = vector.broadcast %cst_51 : f32 to vector<8x1xf32>
    %127 = arith.mulf %126, %125 : vector<8x1xf32>
    %cst_52 = arith.constant 0.000000e+00 : f32
    %128 = vector.broadcast %cst_52 : f32 to vector<8x1xf32>
    %cst_53 = arith.constant 5.000000e+00 : f32
    %129 = vector.broadcast %cst_53 : f32 to vector<8x1xf32>
    %130 = arith.subf %127, %129 : vector<8x1xf32>
    %131 = arith.negf %130 : vector<8x1xf32>
    %132 = math.exp %131 : vector<8x1xf32>
    %cst_54 = arith.constant 1.000000e+00 : f32
    %133 = vector.broadcast %cst_54 : f32 to vector<8x1xf32>
    %134 = arith.addf %133, %132 : vector<8x1xf32>
    %135 = arith.divf %133, %134 : vector<8x1xf32>
    %cst_55 = arith.constant 4.000000e+00 : f32
    %136 = vector.broadcast %cst_55 : f32 to vector<8x1xf32>
    %137 = arith.mulf %136, %135 : vector<8x1xf32>
    %cst_56 = arith.constant 1.000000e+00 : f32
    %138 = vector.broadcast %cst_56 : f32 to vector<8x1xf32>
    %139 = arith.subf %138, %135 : vector<8x1xf32>
    %140 = arith.mulf %137, %139 : vector<8x1xf32>
    %141 = arith.addf %128, %140 : vector<8x1xf32>
    %cst_57 = arith.constant 1.500000e+01 : f32
    %142 = vector.broadcast %cst_57 : f32 to vector<8x1xf32>
    %143 = arith.subf %127, %142 : vector<8x1xf32>
    %144 = arith.negf %143 : vector<8x1xf32>
    %145 = math.exp %144 : vector<8x1xf32>
    %cst_58 = arith.constant 1.000000e+00 : f32
    %146 = vector.broadcast %cst_58 : f32 to vector<8x1xf32>
    %147 = arith.addf %146, %145 : vector<8x1xf32>
    %148 = arith.divf %146, %147 : vector<8x1xf32>
    %cst_59 = arith.constant 8.000000e+00 : f32
    %149 = vector.broadcast %cst_59 : f32 to vector<8x1xf32>
    %150 = arith.mulf %149, %148 : vector<8x1xf32>
    %cst_60 = arith.constant 1.000000e+00 : f32
    %151 = vector.broadcast %cst_60 : f32 to vector<8x1xf32>
    %152 = arith.subf %151, %148 : vector<8x1xf32>
    %153 = arith.mulf %150, %152 : vector<8x1xf32>
    %154 = arith.addf %141, %153 : vector<8x1xf32>
    %cst_61 = arith.constant 2.500000e+01 : f32
    %155 = vector.broadcast %cst_61 : f32 to vector<8x1xf32>
    %156 = arith.subf %127, %155 : vector<8x1xf32>
    %157 = arith.negf %156 : vector<8x1xf32>
    %158 = math.exp %157 : vector<8x1xf32>
    %cst_62 = arith.constant 1.000000e+00 : f32
    %159 = vector.broadcast %cst_62 : f32 to vector<8x1xf32>
    %160 = arith.addf %159, %158 : vector<8x1xf32>
    %161 = arith.divf %159, %160 : vector<8x1xf32>
    %cst_63 = arith.constant 1.200000e+01 : f32
    %162 = vector.broadcast %cst_63 : f32 to vector<8x1xf32>
    %163 = arith.mulf %162, %161 : vector<8x1xf32>
    %cst_64 = arith.constant 1.000000e+00 : f32
    %164 = vector.broadcast %cst_64 : f32 to vector<8x1xf32>
    %165 = arith.subf %164, %161 : vector<8x1xf32>
    %166 = arith.mulf %163, %165 : vector<8x1xf32>
    %167 = arith.addf %154, %166 : vector<8x1xf32>
    %c0_65 = arith.constant 0 : index
    %c0_66 = arith.constant 0 : index
    %168 = vector.load %arg13[%c0_65, %c0_66] : memref<8x1xf32, #tpu.memory_space<vmem>>, vector<8x1xf32>
    tpu.vector_store %arg13[%c0_65, %c0_66], %167 {strides = array<i32>} : memref<8x1xf32, #tpu.memory_space<vmem>>, vector<8x1xf32>,
    return
  }
  func.func @transform_0(%arg0: i32) -> (i32, i32) {
    %c0_i32 = arith.constant 0 : i32
    %c0_i32_0 = arith.constant 0 : i32
    %c0_i32_1 = arith.constant 0 : i32
    return %c0_i32, %c0_i32_0 : i32, i32
  }
  func.func @transform_1(%arg0: i32) -> (i32, i32) {
    %c0_i32 = arith.constant 0 : i32
    %c0_i32_0 = arith.constant 0 : i32
    %c0_i32_1 = arith.constant 0 : i32
    return %c0_i32, %c0_i32_0 : i32, i32
  }
  func.func @transform_2(%arg0: i32) -> (i32, i32) {
    %c0_i32 = arith.constant 0 : i32
    %c0_i32_0 = arith.constant 0 : i32
    %c0_i32_1 = arith.constant 0 : i32
    return %c0_i32, %c0_i32_0 : i32, i32
  }
  func.func @transform_3(%arg0: i32) -> (i32, i32) {
    %c0_i32 = arith.constant 0 : i32
    %c0_i32_0 = arith.constant 0 : i32
    %c0_i32_1 = arith.constant 0 : i32
    return %c0_i32, %c0_i32_0 : i32, i32
  }
  func.func @transform_4(%arg0: i32) -> (i32, i32) {
    %c0_i32 = arith.constant 0 : i32
    %c0_i32_0 = arith.constant 0 : i32
    %c0_i32_1 = arith.constant 0 : i32
    return %c0_i32, %c0_i32_0 : i32, i32
  }
  func.func @transform_5(%arg0: i32) -> (i32, i32) {
    %c0_i32 = arith.constant 0 : i32
    %c0_i32_0 = arith.constant 0 : i32
    %c0_i32_1 = arith.constant 0 : i32
    return %c0_i32, %c0_i32_0 : i32, i32
  }
  func.func @transform_6(%arg0: i32) -> (i32, i32) {
    %c0_i32 = arith.constant 0 : i32
    %c0_i32_0 = arith.constant 0 : i32
    %c0_i32_1 = arith.constant 0 : i32
    return %c0_i32, %c0_i32_0 : i32, i32
  }
  func.func @transform_7(%arg0: i32) -> (i32, i32) {
    %c0_i32 = arith.constant 0 : i32
    %c0_i32_0 = arith.constant 0 : i32
    %c0_i32_1 = arith.constant 0 : i32
    return %c0_i32, %c0_i32_0 : i32, i32
  }
  func.func @transform_8(%arg0: i32) -> (i32, i32) {
    %c0_i32 = arith.constant 0 : i32
    %c0_i32_0 = arith.constant 0 : i32
    %c0_i32_1 = arith.constant 0 : i32
    return %c0_i32, %c0_i32_0 : i32, i32
  }
  func.func @transform_9(%arg0: i32) -> (i32, i32) {
    %c0_i32 = arith.constant 0 : i32
    %c0_i32_0 = arith.constant 0 : i32
    %c0_i32_1 = arith.constant 0 : i32
    return %c0_i32, %c0_i32_0 : i32, i32
  }
  func.func @transform_10(%arg0: i32) -> (i32, i32) {
    %c0_i32 = arith.constant 0 : i32
    %c0_i32_0 = arith.constant 0 : i32
    %c0_i32_1 = arith.constant 0 : i32
    return %c0_i32, %c0_i32_0 : i32, i32
  }
  func.func @transform_11(%arg0: i32) -> (i32, i32) {
    %c0_i32 = arith.constant 0 : i32
    %c0_i32_0 = arith.constant 0 : i32
    %c0_i32_1 = arith.constant 0 : i32
    return %c0_i32, %c0_i32_0 : i32, i32
  }
  func.func @transform_12(%arg0: i32) -> (i32, i32) {
    %c0_i32 = arith.constant 0 : i32
    %c0_i32_0 = arith.constant 0 : i32
    %c0_i32_1 = arith.constant 0 : i32
    return %c0_i32, %c0_i32_0 : i32, i32
  }
}

</mosaic_0001>

<llo_original>
// kernel: tpu_custom_call.1
$region0: #{tpu_custom_call.1}
  #allocation0 [shape = 'u32[]', space=smem, size = 0x4, offset = 0x4, fixed_abs, tag = 'smem constant byte address 0x4 - core index']
  #allocation1 [shape = 'u32[72,128]{1,0:T(1,128)}', space=vmem, size = 0x9000, scoped, tag = 'internal scratch']
  #allocation2 [shape = 'f32[1,1]{1,0:T(1,128)S(1)}', space=vmem, size = 0x200, scoped, tag = 'scoped memory for tpu_custom_call.1']
  %s0 = inlined_call_operand.vmem [shape: f32[128,36], index: 0, kind: input, shape index: {}]
  %s1 = inlined_call_operand.vmem [shape: f32[36,16], index: 1, kind: input, shape index: {}]
  %s2 = inlined_call_operand.vmem [shape: f32[1,16], index: 2, kind: input, shape index: {}]
  %s3 = inlined_call_operand.vmem [shape: f32[288,128], index: 3, kind: input, shape index: {}]
  %s4 = inlined_call_operand.vmem [shape: f32[144,32], index: 4, kind: input, shape index: {}]
  %s5 = inlined_call_operand.vmem [shape: f32[1,32], index: 5, kind: input, shape index: {}]
  %s6 = inlined_call_operand.vmem [shape: f32[288,32], index: 6, kind: input, shape index: {}]
  %s7 = inlined_call_operand.vmem [shape: f32[288,16], index: 7, kind: input, shape index: {}]
  %s8 = inlined_call_operand.vmem [shape: f32[1,16], index: 8, kind: input, shape index: {}]
  %s9 = inlined_call_operand.vmem [shape: f32[72,32], index: 9, kind: input, shape index: {}]
  %s10 = inlined_call_operand.vmem [shape: f32[72,16], index: 10, kind: input, shape index: {}]
  %s11 = inlined_call_operand.<no memory space> [shape: f32[1,1], index: 11, kind: input, shape index: {}]
  %s12 = inlined_call_operand.vmem [shape: f32[8,1], index: 12, kind: output, shape index: {}]
  %s13 = sld [smem:[#allocation0]]
  $region58: #{tpu_custom_call.1} parent=0
    _
  %s15 = ssub.s32 1, %s13
  %s16 = scalar_select 0, %s15, %s13
  %v17 = vstv %s11
  %18 = vst [vmem:[#allocation2] sm:$0x1] %v17
  // Predicated region
  $region2: #{tpu_custom_call.1} parent=0 // pred_check
    _
  $region3: #{tpu_custom_call.1} parent=0 // pred_check_branch
    %20 = sbr.rel (0) target = $region5
  $region4: #{tpu_custom_call.1} parent=0 // pred_region
    _
  $region5: #{tpu_custom_call.1} parent=0 // pred_fallthru
    _
  // Predicated region
  $region6: #{tpu_custom_call.1} parent=0 // pred_check
    _
  $region7: #{tpu_custom_call.1} parent=0 // pred_check_branch
    %22 = sbr.rel (0) target = $region9
  $region8: #{tpu_custom_call.1} parent=0 // pred_region
    _
  $region9: #{tpu_custom_call.1} parent=0 // pred_fallthru
    _
  // Predicated region
  $region10: #{tpu_custom_call.1} parent=0 // pred_check
    _
  $region11: #{tpu_custom_call.1} parent=0 // pred_check_branch
    %24 = sbr.rel (0) target = $region13
  $region12: #{tpu_custom_call.1} parent=0 // pred_region
    _
  $region13: #{tpu_custom_call.1} parent=0 // pred_fallthru
    _
  // Predicated region
  $region14: #{tpu_custom_call.1} parent=0 // pred_check
    _
  $region15: #{tpu_custom_call.1} parent=0 // pred_check_branch
    %26 = sbr.rel (0) target = $region17
  $region16: #{tpu_custom_call.1} parent=0 // pred_region
    _
  $region17: #{tpu_custom_call.1} parent=0 // pred_fallthru
    _
  // Predicated region
  $region18: #{tpu_custom_call.1} parent=0 // pred_check
    _
  $region19: #{tpu_custom_call.1} parent=0 // pred_check_branch
    %28 = sbr.rel (0) target = $region21
  $region20: #{tpu_custom_call.1} parent=0 // pred_region
    _
  $region21: #{tpu_custom_call.1} parent=0 // pred_fallthru
    _
  // Predicated region
  $region22: #{tpu_custom_call.1} parent=0 // pred_check
    _
  $region23: #{tpu_custom_call.1} parent=0 // pred_check_branch
    %30 = sbr.rel (0) target = $region25
  $region24: #{tpu_custom_call.1} parent=0 // pred_region
    _
  $region25: #{tpu_custom_call.1} parent=0 // pred_fallthru
    _
  // Predicated region
  $region26: #{tpu_custom_call.1} parent=0 // pred_check
    _
  $region27: #{tpu_custom_call.1} parent=0 // pred_check_branch
    %32 = sbr.rel (0) target = $region29
  $region28: #{tpu_custom_call.1} parent=0 // pred_region
    _
  $region29: #{tpu_custom_call.1} parent=0 // pred_fallthru
    _
  // Predicated region
  $region30: #{tpu_custom_call.1} parent=0 // pred_check
    _
  $region31: #{tpu_custom_call.1} parent=0 // pred_check_branch
    %34 = sbr.rel (0) target = $region33
  $region32: #{tpu_custom_call.1} parent=0 // pred_region
    _
  $region33: #{tpu_custom_call.1} parent=0 // pred_fallthru
    _
  // Predicated region
  $region34: #{tpu_custom_call.1} parent=0 // pred_check
    _
  $region35: #{tpu_custom_call.1} parent=0 // pred_check_branch
    %36 = sbr.rel (0) target = $region37
  $region36: #{tpu_custom_call.1} parent=0 // pred_region
    _
  $region37: #{tpu_custom_call.1} parent=0 // pred_fallthru
    _
  // Predicated region
  $region38: #{tpu_custom_call.1} parent=0 // pred_check
    _
  $region39: #{tpu_custom_call.1} parent=0 // pred_check_branch
    %38 = sbr.rel (0) target = $region41
  $region40: #{tpu_custom_call.1} parent=0 // pred_region
    _
  $region41: #{tpu_custom_call.1} parent=0 // pred_fallthru
    _
  // Predicated region
  $region42: #{tpu_custom_call.1} parent=0 // pred_check
    _
  $region43: #{tpu_custom_call.1} parent=0 // pred_check_branch
    %40 = sbr.rel (0) target = $region45
  $region44: #{tpu_custom_call.1} parent=0 // pred_region
    _
  $region45: #{tpu_custom_call.1} parent=0 // pred_fallthru
    _
  // Predicated region
  $region46: #{tpu_custom_call.1} parent=0 // pred_check
    _
  $region47: #{tpu_custom_call.1} parent=0 // pred_check_branch
    %42 = sbr.rel (0) target = $region49
  $region48: #{tpu_custom_call.1} parent=0 // pred_region
    _
  $region49: #{tpu_custom_call.1} parent=0 // pred_fallthru
    _
  %v43 = vld [vmem:[%s1] sm:$0xff]
  %v44 = vld [vmem:[%s1 + $0x8] sm:$0xff]
  %v45 = vld [vmem:[%s1 + $0x10] sm:$0xff]
  %v46 = vld [vmem:[%s1 + $0x18] sm:$0xff]
  %v47 = vld [vmem:[%s1 + $0x20] sm:$0xf]
  %v48 = vld [vmem:[%s0] sm:$0xff]
  %v49 = vld [vmem:[%s0 + $0x8] sm:$0xff]
  %v50 = vld [vmem:[%s0 + $0x10] sm:$0xff]
  %v51 = vld [vmem:[%s0 + $0x18] sm:$0xff]
  %v52 = vld [vmem:[%s0 + $0x20] sm:$0xff]
  %v53 = vld [vmem:[%s0 + $0x28] sm:$0xff]
  %v54 = vld [vmem:[%s0 + $0x30] sm:$0xff]
  %v55 = vld [vmem:[%s0 + $0x38] sm:$0xff]
  %v56 = vld [vmem:[%s0 + $0x40] sm:$0xff]
  %v57 = vld [vmem:[%s0 + $0x48] sm:$0xff]
  %v58 = vld [vmem:[%s0 + $0x50] sm:$0xff]
  %v59 = vld [vmem:[%s0 + $0x58] sm:$0xff]
  %v60 = vld [vmem:[%s0 + $0x60] sm:$0xff]
  %v61 = vld [vmem:[%s0 + $0x68] sm:$0xff]
  %v62 = vld [vmem:[%s0 + $0x70] sm:$0xff]
  %v63 = vld [vmem:[%s0 + $0x78] sm:$0xff]
  %v64 = vld [vmem:[%s2] sm:$0x1]
  %v66 = vperm.slane %v64, 0
  %vm68 = vcmask 293888
  %v70 = vsel %vm68, %v48, 0
  %v73 = vsel %vm68, %v49, 0
  %v76 = vsel %vm68, %v50, 0
  %v79 = vsel %vm68, %v51, 0
  %v82 = vsel %vm68, %v52, 0
  %v85 = vsel %vm68, %v53, 0
  %v88 = vsel %vm68, %v54, 0
  %v91 = vsel %vm68, %v55, 0
  %v94 = vsel %vm68, %v56, 0
  %v97 = vsel %vm68, %v57, 0
  %v100 = vsel %vm68, %v58, 0
  %v103 = vsel %vm68, %v59, 0
  %v106 = vsel %vm68, %v60, 0
  %v109 = vsel %vm68, %v61, 0
  %v112 = vsel %vm68, %v62, 0
  %v115 = vsel %vm68, %v63, 0
  %vm117 = vcmask 1043456
  %v119 = vsel %vm117, %v47, 0
  %121 = vmatpush.msra.mxu0 0.0
  %122 = vmatpush.msra.mxu0 0.0
  %123 = vmatpush.msra.mxu0 0.0
  %124 = vmatpush.msra.mxu0 0.0
  %125 = vmatpush.msra.mxu0 0.0
  %126 = vmatpush.msra.mxu0 0.0
  %127 = vmatpush.msra.mxu0 0.0
  %128 = vmatpush.msra.mxu0 0.0
  %129 = vmatpush.msra.mxu0 0.0
  %130 = vmatpush.msra.mxu0 0.0
  %131 = vmatpush.msra.mxu0 0.0
  %132 = vmatpush.msra.mxu0 %v119
  %133 = vmatpush.msra.mxu0 %v46
  %134 = vmatpush.msra.mxu0 %v45
  %135 = vmatpush.msra.mxu0 %v44
  %136 = vmatpush.msra.mxu0 %v43
  %137 = vmatmul.f32.gmra.mxu0 %v70
  %v138 = vpop.f32.mrf.mxu0
  %v139 = vadd.f32 %v66, %v138
  %140 = vmatmul.f32.gmra.mxu0 %v73
  %v141 = vpop.f32.mrf.mxu0
  %v142 = vadd.f32 %v66, %v141
  %143 = vmatmul.f32.gmra.mxu0 %v76
  %v144 = vpop.f32.mrf.mxu0
  %v145 = vadd.f32 %v66, %v144
  %146 = vmatmul.f32.gmra.mxu0 %v79
  %v147 = vpop.f32.mrf.mxu0
  %v148 = vadd.f32 %v66, %v147
  %149 = vmatmul.f32.gmra.mxu0 %v82
  %v150 = vpop.f32.mrf.mxu0
  %v151 = vadd.f32 %v66, %v150
  %152 = vmatmul.f32.gmra.mxu0 %v85
  %v153 = vpop.f32.mrf.mxu0
  %v154 = vadd.f32 %v66, %v153
  %155 = vmatmul.f32.gmra.mxu0 %v88
  %v156 = vpop.f32.mrf.mxu0
  %v157 = vadd.f32 %v66, %v156
  %158 = vmatmul.f32.gmra.mxu0 %v91
  %v159 = vpop.f32.mrf.mxu0
  %v160 = vadd.f32 %v66, %v159
  %161 = vmatmul.f32.gmra.mxu0 %v94
  %v162 = vpop.f32.mrf.mxu0
  %v163 = vadd.f32 %v66, %v162
  %164 = vmatmul.f32.gmra.mxu0 %v97
  %v165 = vpop.f32.mrf.mxu0
  %v166 = vadd.f32 %v66, %v165
  %167 = vmatmul.f32.gmra.mxu0 %v100
  %v168 = vpop.f32.mrf.mxu0
  %v169 = vadd.f32 %v66, %v168
  %170 = vmatmul.f32.gmra.mxu0 %v103
  %v171 = vpop.f32.mrf.mxu0
  %v172 = vadd.f32 %v66, %v171
  %173 = vmatmul.f32.gmra.mxu0 %v106
  %v174 = vpop.f32.mrf.mxu0
  %v175 = vadd.f32 %v66, %v174
  %176 = vmatmul.f32.gmra.mxu0 %v109
  %v177 = vpop.f32.mrf.mxu0
  %v178 = vadd.f32 %v66, %v177
  %179 = vmatmul.f32.gmra.mxu0 %v112
  %v180 = vpop.f32.mrf.mxu0
  %v181 = vadd.f32 %v66, %v180
  %182 = vmatmul.f32.gmra.mxu0 %v115
  %v183 = vpop.f32.mrf.mxu0
  %v184 = vadd.f32 %v66, %v183
  %185 = vdwg.mxu0
  %v186 = vmax.f32 %v139, 0.0
  %v187 = vmax.f32 %v142, 0.0
  %v188 = vmax.f32 %v145, 0.0
  %v189 = vmax.f32 %v148, 0.0
  %v190 = vmax.f32 %v151, 0.0
  %v191 = vmax.f32 %v154, 0.0
  %v192 = vmax.f32 %v157, 0.0
  %v193 = vmax.f32 %v160, 0.0
  %v194 = vmax.f32 %v163, 0.0
  %v195 = vmax.f32 %v166, 0.0
  %v196 = vmax.f32 %v169, 0.0
  %v197 = vmax.f32 %v172, 0.0
  %v198 = vmax.f32 %v175, 0.0
  %v199 = vmax.f32 %v178, 0.0
  %v200 = vmax.f32 %v181, 0.0
  %v201 = vmax.f32 %v184, 0.0
  %v202 = vld [vmem:[%s3] sm:$0xff]
  %v203 = vld [vmem:[%s3 + $0x8] sm:$0xff]
  %v204 = vld [vmem:[%s3 + $0x10] sm:$0xff]
  %v205 = vld [vmem:[%s3 + $0x18] sm:$0xff]
  %v206 = vld [vmem:[%s3 + $0x20] sm:$0xff]
  %v207 = vld [vmem:[%s3 + $0x28] sm:$0xff]
  %v208 = vld [vmem:[%s3 + $0x30] sm:$0xff]
  %v209 = vld [vmem:[%s3 + $0x38] sm:$0xff]
  %v210 = vld [vmem:[%s3 + $0x40] sm:$0xff]
  %v211 = vld [vmem:[%s3 + $0x48] sm:$0xff]
  %v212 = vld [vmem:[%s3 + $0x50] sm:$0xff]
  %v213 = vld [vmem:[%s3 + $0x58] sm:$0xff]
  %v214 = vld [vmem:[%s3 + $0x60] sm:$0xff]
  %v215 = vld [vmem:[%s3 + $0x68] sm:$0xff]
  %v216 = vld [vmem:[%s3 + $0x70] sm:$0xff]
  %v217 = vld [vmem:[%s3 + $0x78] sm:$0xff]
  %v218 = vld [vmem:[%s3 + $0x80] sm:$0xff]
  %v219 = vld [vmem:[%s3 + $0x88] sm:$0xff]
  %v220 = vld [vmem:[%s3 + $0x90] sm:$0xff]
  %v221 = vld [vmem:[%s3 + $0x98] sm:$0xff]
  %v222 = vld [vmem:[%s3 + $0xa0] sm:$0xff]
  %v223 = vld [vmem:[%s3 + $0xa8] sm:$0xff]
  %v224 = vld [vmem:[%s3 + $0xb0] sm:$0xff]
  %v225 = vld [vmem:[%s3 + $0xb8] sm:$0xff]
  %v226 = vld [vmem:[%s3 + $0xc0] sm:$0xff]
  %v227 = vld [vmem:[%s3 + $0xc8] sm:$0xff]
  %v228 = vld [vmem:[%s3 + $0xd0] sm:$0xff]
  %v229 = vld [vmem:[%s3 + $0xd8] sm:$0xff]
  %v230 = vld [vmem:[%s3 + $0xe0] sm:$0xff]
  %v231 = vld [vmem:[%s3 + $0xe8] sm:$0xff]
  %v232 = vld [vmem:[%s3 + $0xf0] sm:$0xff]
  %v233 = vld [vmem:[%s3 + $0xf8] sm:$0xff]
  %v234 = vld [vmem:[%s3 + $0x100] sm:$0xff]
  %v235 = vld [vmem:[%s3 + $0x108] sm:$0xff]
  %v236 = vld [vmem:[%s3 + $0x110] sm:$0xff]
  %v237 = vld [vmem:[%s3 + $0x118] sm:$0xff]
  %v238 = vld [vmem:[%s4] sm:$0xff]
  %v239 = vld [vmem:[%s4 + $0x8] sm:$0xff]
  %v240 = vld [vmem:[%s4 + $0x10] sm:$0xff]
  %v241 = vld [vmem:[%s4 + $0x18] sm:$0xff]
  %v242 = vld [vmem:[%s4 + $0x20] sm:$0xff]
  %v243 = vld [vmem:[%s4 + $0x28] sm:$0xff]
  %v244 = vld [vmem:[%s4 + $0x30] sm:$0xff]
  %v245 = vld [vmem:[%s4 + $0x38] sm:$0xff]
  %v246 = vld [vmem:[%s4 + $0x40] sm:$0xff]
  %v247 = vld [vmem:[%s4 + $0x48] sm:$0xff]
  %v248 = vld [vmem:[%s4 + $0x50] sm:$0xff]
  %v249 = vld [vmem:[%s4 + $0x58] sm:$0xff]
  %v250 = vld [vmem:[%s4 + $0x60] sm:$0xff]
  %v251 = vld [vmem:[%s4 + $0x68] sm:$0xff]
  %v252 = vld [vmem:[%s4 + $0x70] sm:$0xff]
  %v253 = vld [vmem:[%s4 + $0x78] sm:$0xff]
  %v254 = vld [vmem:[%s4 + $0x80] sm:$0xff]
  %v255 = vld [vmem:[%s4 + $0x88] sm:$0xff]
  %256 = vmatpush.msra.mxu0 %v201
  %257 = vmatpush.msra.mxu0 %v200
  %258 = vmatpush.msra.mxu0 %v199
  %259 = vmatpush.msra.mxu0 %v198
  %260 = vmatpush.msra.mxu0 %v197
  %261 = vmatpush.msra.mxu0 %v196
  %262 = vmatpush.msra.mxu0 %v195
  %263 = vmatpush.msra.mxu0 %v194
  %264 = vmatpush.msra.mxu0 %v193
  %265 = vmatpush.msra.mxu0 %v192
  %266 = vmatpush.msra.mxu0 %v191
  %267 = vmatpush.msra.mxu0 %v190
  %268 = vmatpush.msra.mxu0 %v189
  %269 = vmatpush.msra.mxu0 %v188
  %270 = vmatpush.msra.mxu0 %v187
  %271 = vmatpush.msra.mxu0 %v186
  %272 = vmatmul.f32.gmra.mxu0 %v202
  %v273 = vpop.f32.mrf.mxu0
  %v274 = vadd.f32 0.0, %v273
  %275 = vmatmul.f32.gmra.mxu0 %v203
  %v276 = vpop.f32.mrf.mxu0
  %v277 = vadd.f32 0.0, %v276
  %278 = vmatmul.f32.gmra.mxu0 %v204
  %v279 = vpop.f32.mrf.mxu0
  %v280 = vadd.f32 0.0, %v279
  %281 = vmatmul.f32.gmra.mxu0 %v205
  %v282 = vpop.f32.mrf.mxu0
  %v283 = vadd.f32 0.0, %v282
  %284 = vmatmul.f32.gmra.mxu0 %v206
  %v285 = vpop.f32.mrf.mxu0
  %v286 = vadd.f32 0.0, %v285
  %287 = vmatmul.f32.gmra.mxu0 %v207
  %v288 = vpop.f32.mrf.mxu0
  %v289 = vadd.f32 0.0, %v288
  %290 = vmatmul.f32.gmra.mxu0 %v208
  %v291 = vpop.f32.mrf.mxu0
  %v292 = vadd.f32 0.0, %v291
  %293 = vmatmul.f32.gmra.mxu0 %v209
  %v294 = vpop.f32.mrf.mxu0
  %v295 = vadd.f32 0.0, %v294
  %296 = vmatmul.f32.gmra.mxu0 %v210
  %v297 = vpop.f32.mrf.mxu0
  %v298 = vadd.f32 0.0, %v297
  %299 = vmatmul.f32.gmra.mxu0 %v211
  %v300 = vpop.f32.mrf.mxu0
  %v301 = vadd.f32 0.0, %v300
  %302 = vmatmul.f32.gmra.mxu0 %v212
  %v303 = vpop.f32.mrf.mxu0
  %v304 = vadd.f32 0.0, %v303
  %305 = vmatmul.f32.gmra.mxu0 %v213
  %v306 = vpop.f32.mrf.mxu0
  %v307 = vadd.f32 0.0, %v306
  %308 = vmatmul.f32.gmra.mxu0 %v214
  %v309 = vpop.f32.mrf.mxu0
  %v310 = vadd.f32 0.0, %v309
  %311 = vmatmul.f32.gmra.mxu0 %v215
  %v312 = vpop.f32.mrf.mxu0
  %v313 = vadd.f32 0.0, %v312
  %314 = vmatmul.f32.gmra.mxu0 %v216
  %v315 = vpop.f32.mrf.mxu0
  %v316 = vadd.f32 0.0, %v315
  %317 = vmatmul.f32.gmra.mxu0 %v217
  %v318 = vpop.f32.mrf.mxu0
  %v319 = vadd.f32 0.0, %v318
  %320 = vmatmul.f32.gmra.mxu0 %v218
  %v321 = vpop.f32.mrf.mxu0
  %v322 = vadd.f32 0.0, %v321
  %323 = vmatmul.f32.gmra.mxu0 %v219
  %v324 = vpop.f32.mrf.mxu0
  %v325 = vadd.f32 0.0, %v324
  %326 = vmatmul.f32.gmra.mxu0 %v220
  %v327 = vpop.f32.mrf.mxu0
  %v328 = vadd.f32 0.0, %v327
  %329 = vmatmul.f32.gmra.mxu0 %v221
  %v330 = vpop.f32.mrf.mxu0
  %v331 = vadd.f32 0.0, %v330
  %332 = vmatmul.f32.gmra.mxu0 %v222
  %v333 = vpop.f32.mrf.mxu0
  %v334 = vadd.f32 0.0, %v333
  %335 = vmatmul.f32.gmra.mxu0 %v223
  %v336 = vpop.f32.mrf.mxu0
  %v337 = vadd.f32 0.0, %v336
  %338 = vmatmul.f32.gmra.mxu0 %v224
  %v339 = vpop.f32.mrf.mxu0
  %v340 = vadd.f32 0.0, %v339
  %341 = vmatmul.f32.gmra.mxu0 %v225
  %v342 = vpop.f32.mrf.mxu0
  %v343 = vadd.f32 0.0, %v342
  %344 = vmatmul.f32.gmra.mxu0 %v226
  %v345 = vpop.f32.mrf.mxu0
  %v346 = vadd.f32 0.0, %v345
  %347 = vmatmul.f32.gmra.mxu0 %v227
  %v348 = vpop.f32.mrf.mxu0
  %v349 = vadd.f32 0.0, %v348
  %350 = vmatmul.f32.gmra.mxu0 %v228
  %v351 = vpop.f32.mrf.mxu0
  %v352 = vadd.f32 0.0, %v351
  %353 = vmatmul.f32.gmra.mxu0 %v229
  %v354 = vpop.f32.mrf.mxu0
  %v355 = vadd.f32 0.0, %v354
  %356 = vmatmul.f32.gmra.mxu0 %v230
  %v357 = vpop.f32.mrf.mxu0
  %v358 = vadd.f32 0.0, %v357
  %359 = vmatmul.f32.gmra.mxu0 %v231
  %v360 = vpop.f32.mrf.mxu0
  %v361 = vadd.f32 0.0, %v360
  %362 = vmatmul.f32.gmra.mxu0 %v232
  %v363 = vpop.f32.mrf.mxu0
  %v364 = vadd.f32 0.0, %v363
  %365 = vmatmul.f32.gmra.mxu0 %v233
  %v366 = vpop.f32.mrf.mxu0
  %v367 = vadd.f32 0.0, %v366
  %368 = vmatmul.f32.gmra.mxu0 %v234
  %v369 = vpop.f32.mrf.mxu0
  %v370 = vadd.f32 0.0, %v369
  %371 = vmatmul.f32.gmra.mxu0 %v235
  %v372 = vpop.f32.mrf.mxu0
  %v373 = vadd.f32 0.0, %v372
  %374 = vmatmul.f32.gmra.mxu0 %v236
  %v375 = vpop.f32.mrf.mxu0
  %v376 = vadd.f32 0.0, %v375
  %377 = vmatmul.f32.gmra.mxu0 %v237
  %v378 = vpop.f32.mrf.mxu0
  %v379 = vadd.f32 0.0, %v378
  %380 = vdwg.mxu0
  %vm381 = vcmask 130048
  %v383 = vsel %vm381, %v286, 0
  %v386 = vsel %vm381, %v289, 0
  %v389 = vsel %vm381, %v292, 0
  %v392 = vsel %vm381, %v295, 0
  %394 = vmatpush.msra.mxu0 0.0
  %395 = vmatpush.msra.mxu0 0.0
  %396 = vmatpush.msra.mxu0 0.0
  %397 = vmatpush.msra.mxu0 0.0
  %398 = vmatpush.msra.mxu0 0.0
  %399 = vmatpush.msra.mxu0 0.0
  %400 = vmatpush.msra.mxu0 0.0
  %401 = vmatpush.msra.mxu0 0.0
  %402 = vmatpush.msra.mxu0 0.0
  %403 = vmatpush.msra.mxu0 0.0
  %404 = vmatpush.msra.mxu0 0.0
  %405 = vmatpush.msra.mxu0 0.0
  %406 = vmatpush.msra.mxu0 0.0
  %407 = vmatpush.msra.mxu0 0.0
  %408 = vmatpush.msra.mxu0 %v241
  %409 = vmatpush.msra.mxu0 %v240
  %410 = vmatmul.f32.gmra.mxu0 %v383
  %v411 = vpop.f32.mrf.mxu0
  %v412 = vadd.f32 0.0, %v411
  %413 = vmatmul.f32.gmra.mxu0 %v386
  %v414 = vpop.f32.mrf.mxu0
  %v415 = vadd.f32 0.0, %v414
  %416 = vmatmul.f32.gmra.mxu0 %v389
  %v417 = vpop.f32.mrf.mxu0
  %v418 = vadd.f32 0.0, %v417
  %419 = vmatmul.f32.gmra.mxu0 %v392
  %v420 = vpop.f32.mrf.mxu0
  %v421 = vadd.f32 0.0, %v420
  %422 = vdwg.mxu0
  %v424 = vsel %vm381, %v274, 0
  %v427 = vsel %vm381, %v277, 0
  %v430 = vsel %vm381, %v280, 0
  %v433 = vsel %vm381, %v283, 0
  %435 = vmatpush.msra.mxu0 0.0
  %436 = vmatpush.msra.mxu0 0.0
  %437 = vmatpush.msra.mxu0 0.0
  %438 = vmatpush.msra.mxu0 0.0
  %439 = vmatpush.msra.mxu0 0.0
  %440 = vmatpush.msra.mxu0 0.0
  %441 = vmatpush.msra.mxu0 0.0
  %442 = vmatpush.msra.mxu0 0.0
  %443 = vmatpush.msra.mxu0 0.0
  %444 = vmatpush.msra.mxu0 0.0
  %445 = vmatpush.msra.mxu0 0.0
  %446 = vmatpush.msra.mxu0 0.0
  %447 = vmatpush.msra.mxu0 0.0
  %448 = vmatpush.msra.mxu0 0.0
  %449 = vmatpush.msra.mxu0 %v239
  %450 = vmatpush.msra.mxu0 %v238
  %451 = vmatmul.f32.gmra.mxu0 %v424
  %v452 = vpop.f32.mrf.mxu0
  %v453 = vadd.f32 %v412, %v452
  %454 = vmatmul.f32.gmra.mxu0 %v427
  %v455 = vpop.f32.mrf.mxu0
  %v456 = vadd.f32 %v415, %v455
  %457 = vmatmul.f32.gmra.mxu0 %v430
  %v458 = vpop.f32.mrf.mxu0
  %v459 = vadd.f32 %v418, %v458
  %460 = vmatmul.f32.gmra.mxu0 %v433
  %v461 = vpop.f32.mrf.mxu0
  %v462 = vadd.f32 %v421, %v461
  %463 = vdwg.mxu0
  %v465 = vsel %vm381, %v298, 0
  %v468 = vsel %vm381, %v301, 0
  %v471 = vsel %vm381, %v304, 0
  %v474 = vsel %vm381, %v307, 0
  %476 = vmatpush.msra.mxu0 0.0
  %477 = vmatpush.msra.mxu0 0.0
  %478 = vmatpush.msra.mxu0 0.0
  %479 = vmatpush.msra.mxu0 0.0
  %480 = vmatpush.msra.mxu0 0.0
  %481 = vmatpush.msra.mxu0 0.0
  %482 = vmatpush.msra.mxu0 0.0
  %483 = vmatpush.msra.mxu0 0.0
  %484 = vmatpush.msra.mxu0 0.0
  %485 = vmatpush.msra.mxu0 0.0
  %486 = vmatpush.msra.mxu0 0.0
  %487 = vmatpush.msra.mxu0 0.0
  %488 = vmatpush.msra.mxu0 0.0
  %489 = vmatpush.msra.mxu0 0.0
  %490 = vmatpush.msra.mxu0 %v243
  %491 = vmatpush.msra.mxu0 %v242
  %492 = vmatmul.f32.gmra.mxu0 %v465
  %v493 = vpop.f32.mrf.mxu0
  %v494 = vadd.f32 0.0, %v493
  %495 = vmatmul.f32.gmra.mxu0 %v468
  %v496 = vpop.f32.mrf.mxu0
  %v497 = vadd.f32 0.0, %v496
  %498 = vmatmul.f32.gmra.mxu0 %v471
  %v499 = vpop.f32.mrf.mxu0
  %v500 = vadd.f32 0.0, %v499
  %501 = vmatmul.f32.gmra.mxu0 %v474
  %v502 = vpop.f32.mrf.mxu0
  %v503 = vadd.f32 0.0, %v502
  %504 = vdwg.mxu0
  %v505 = vadd.f32 %v453, %v494
  %v506 = vadd.f32 %v456, %v497
  %v507 = vadd.f32 %v459, %v500
  %v508 = vadd.f32 %v462, %v503
  %v510 = vsel %vm381, %v310, 0
  %v513 = vsel %vm381, %v313, 0
  %v516 = vsel %vm381, %v316, 0
  %v519 = vsel %vm381, %v319, 0
  %521 = vmatpush.msra.mxu0 0.0
  %522 = vmatpush.msra.mxu0 0.0
  %523 = vmatpush.msra.mxu0 0.0
  %524 = vmatpush.msra.mxu0 0.0
  %525 = vmatpush.msra.mxu0 0.0
  %526 = vmatpush.msra.mxu0 0.0
  %527 = vmatpush.msra.mxu0 0.0
  %528 = vmatpush.msra.mxu0 0.0
  %529 = vmatpush.msra.mxu0 0.0
  %530 = vmatpush.msra.mxu0 0.0
  %531 = vmatpush.msra.mxu0 0.0
  %532 = vmatpush.msra.mxu0 0.0
  %533 = vmatpush.msra.mxu0 0.0
  %534 = vmatpush.msra.mxu0 0.0
  %535 = vmatpush.msra.mxu0 %v245
  %536 = vmatpush.msra.mxu0 %v244
  %537 = vmatmul.f32.gmra.mxu0 %v510
  %v538 = vpop.f32.mrf.mxu0
  %v539 = vadd.f32 0.0, %v538
  %540 = vmatmul.f32.gmra.mxu0 %v513
  %v541 = vpop.f32.mrf.mxu0
  %v542 = vadd.f32 0.0, %v541
  %543 = vmatmul.f32.gmra.mxu0 %v516
  %v544 = vpop.f32.mrf.mxu0
  %v545 = vadd.f32 0.0, %v544
  %546 = vmatmul.f32.gmra.mxu0 %v519
  %v547 = vpop.f32.mrf.mxu0
  %v548 = vadd.f32 0.0, %v547
  %549 = vdwg.mxu0
  %v550 = vadd.f32 %v505, %v539
  %v551 = vadd.f32 %v506, %v542
  %v552 = vadd.f32 %v507, %v545
  %v553 = vadd.f32 %v508, %v548
  %v555 = vsel %vm381, %v322, 0
  %v558 = vsel %vm381, %v325, 0
  %v561 = vsel %vm381, %v328, 0
  %v564 = vsel %vm381, %v331, 0
  %566 = vmatpush.msra.mxu0 0.0
  %567 = vmatpush.msra.mxu0 0.0
  %568 = vmatpush.msra.mxu0 0.0
  %569 = vmatpush.msra.mxu0 0.0
  %570 = vmatpush.msra.mxu0 0.0
  %571 = vmatpush.msra.mxu0 0.0
  %572 = vmatpush.msra.mxu0 0.0
  %573 = vmatpush.msra.mxu0 0.0
  %574 = vmatpush.msra.mxu0 0.0
  %575 = vmatpush.msra.mxu0 0.0
  %576 = vmatpush.msra.mxu0 0.0
  %577 = vmatpush.msra.mxu0 0.0
  %578 = vmatpush.msra.mxu0 0.0
  %579 = vmatpush.msra.mxu0 0.0
  %580 = vmatpush.msra.mxu0 %v247
  %581 = vmatpush.msra.mxu0 %v246
  %582 = vmatmul.f32.gmra.mxu0 %v555
  %v583 = vpop.f32.mrf.mxu0
  %v584 = vadd.f32 0.0, %v583
  %585 = vmatmul.f32.gmra.mxu0 %v558
  %v586 = vpop.f32.mrf.mxu0
  %v587 = vadd.f32 0.0, %v586
  %588 = vmatmul.f32.gmra.mxu0 %v561
  %v589 = vpop.f32.mrf.mxu0
  %v590 = vadd.f32 0.0, %v589
  %591 = vmatmul.f32.gmra.mxu0 %v564
  %v592 = vpop.f32.mrf.mxu0
  %v593 = vadd.f32 0.0, %v592
  %594 = vdwg.mxu0
  %v595 = vadd.f32 %v550, %v584
  %v596 = vadd.f32 %v551, %v587
  %v597 = vadd.f32 %v552, %v590
  %v598 = vadd.f32 %v553, %v593
  %v600 = vsel %vm381, %v334, 0
  %v603 = vsel %vm381, %v337, 0
  %v606 = vsel %vm381, %v340, 0
  %v609 = vsel %vm381, %v343, 0
  %611 = vmatpush.msra.mxu0 0.0
  %612 = vmatpush.msra.mxu0 0.0
  %613 = vmatpush.msra.mxu0 0.0
  %614 = vmatpush.msra.mxu0 0.0
  %615 = vmatpush.msra.mxu0 0.0
  %616 = vmatpush.msra.mxu0 0.0
  %617 = vmatpush.msra.mxu0 0.0
  %618 = vmatpush.msra.mxu0 0.0
  %619 = vmatpush.msra.mxu0 0.0
  %620 = vmatpush.msra.mxu0 0.0
  %621 = vmatpush.msra.mxu0 0.0
  %622 = vmatpush.msra.mxu0 0.0
  %623 = vmatpush.msra.mxu0 0.0
  %624 = vmatpush.msra.mxu0 0.0
  %625 = vmatpush.msra.mxu0 %v249
  %626 = vmatpush.msra.mxu0 %v248
  %627 = vmatmul.f32.gmra.mxu0 %v600
  %v628 = vpop.f32.mrf.mxu0
  %v629 = vadd.f32 0.0, %v628
  %630 = vmatmul.f32.gmra.mxu0 %v603
  %v631 = vpop.f32.mrf.mxu0
  %v632 = vadd.f32 0.0, %v631
  %633 = vmatmul.f32.gmra.mxu0 %v606
  %v634 = vpop.f32.mrf.mxu0
  %v635 = vadd.f32 0.0, %v634
  %636 = vmatmul.f32.gmra.mxu0 %v609
  %v637 = vpop.f32.mrf.mxu0
  %v638 = vadd.f32 0.0, %v637
  %639 = vdwg.mxu0
  %v640 = vadd.f32 %v595, %v629
  %v641 = vadd.f32 %v596, %v632
  %v642 = vadd.f32 %v597, %v635
  %v643 = vadd.f32 %v598, %v638
  %v645 = vsel %vm381, %v346, 0
  %v648 = vsel %vm381, %v349, 0
  %v651 = vsel %vm381, %v352, 0
  %v654 = vsel %vm381, %v355, 0
  %656 = vmatpush.msra.mxu0 0.0
  %657 = vmatpush.msra.mxu0 0.0
  %658 = vmatpush.msra.mxu0 0.0
  %659 = vmatpush.msra.mxu0 0.0
  %660 = vmatpush.msra.mxu0 0.0
  %661 = vmatpush.msra.mxu0 0.0
  %662 = vmatpush.msra.mxu0 0.0
  %663 = vmatpush.msra.mxu0 0.0
  %664 = vmatpush.msra.mxu0 0.0
  %665 = vmatpush.msra.mxu0 0.0
  %666 = vmatpush.msra.mxu0 0.0
  %667 = vmatpush.msra.mxu0 0.0
  %668 = vmatpush.msra.mxu0 0.0
  %669 = vmatpush.msra.mxu0 0.0
  %670 = vmatpush.msra.mxu0 %v251
  %671 = vmatpush.msra.mxu0 %v250
  %672 = vmatmul.f32.gmra.mxu0 %v645
  %v673 = vpop.f32.mrf.mxu0
  %v674 = vadd.f32 0.0, %v673
  %675 = vmatmul.f32.gmra.mxu0 %v648
  %v676 = vpop.f32.mrf.mxu0
  %v677 = vadd.f32 0.0, %v676
  %678 = vmatmul.f32.gmra.mxu0 %v651
  %v679 = vpop.f32.mrf.mxu0
  %v680 = vadd.f32 0.0, %v679
  %681 = vmatmul.f32.gmra.mxu0 %v654
  %v682 = vpop.f32.mrf.mxu0
  %v683 = vadd.f32 0.0, %v682
  %684 = vdwg.mxu0
  %v685 = vadd.f32 %v640, %v674
  %v686 = vadd.f32 %v641, %v677
  %v687 = vadd.f32 %v642, %v680
  %v688 = vadd.f32 %v643, %v683
  %v690 = vsel %vm381, %v358, 0
  %v693 = vsel %vm381, %v361, 0
  %v696 = vsel %vm381, %v364, 0
  %v699 = vsel %vm381, %v367, 0
  %701 = vmatpush.msra.mxu0 0.0
  %702 = vmatpush.msra.mxu0 0.0
  %703 = vmatpush.msra.mxu0 0.0
  %704 = vmatpush.msra.mxu0 0.0
  %705 = vmatpush.msra.mxu0 0.0
  %706 = vmatpush.msra.mxu0 0.0
  %707 = vmatpush.msra.mxu0 0.0
  %708 = vmatpush.msra.mxu0 0.0
  %709 = vmatpush.msra.mxu0 0.0
  %710 = vmatpush.msra.mxu0 0.0
  %711 = vmatpush.msra.mxu0 0.0
  %712 = vmatpush.msra.mxu0 0.0
  %713 = vmatpush.msra.mxu0 0.0
  %714 = vmatpush.msra.mxu0 0.0
  %715 = vmatpush.msra.mxu0 %v253
  %716 = vmatpush.msra.mxu0 %v252
  %717 = vmatmul.f32.gmra.mxu0 %v690
  %v718 = vpop.f32.mrf.mxu0
  %v719 = vadd.f32 0.0, %v718
  %720 = vmatmul.f32.gmra.mxu0 %v693
  %v721 = vpop.f32.mrf.mxu0
  %v722 = vadd.f32 0.0, %v721
  %723 = vmatmul.f32.gmra.mxu0 %v696
  %v724 = vpop.f32.mrf.mxu0
  %v725 = vadd.f32 0.0, %v724
  %726 = vmatmul.f32.gmra.mxu0 %v699
  %v727 = vpop.f32.mrf.mxu0
  %v728 = vadd.f32 0.0, %v727
  %729 = vdwg.mxu0
  %v730 = vadd.f32 %v685, %v719
  %v731 = vadd.f32 %v686, %v722
  %v732 = vadd.f32 %v687, %v725
  %v733 = vadd.f32 %v688, %v728
  %v735 = vsel %vm381, %v370, 0
  %v738 = vsel %vm381, %v373, 0
  %v741 = vsel %vm381, %v376, 0
  %v744 = vsel %vm381, %v379, 0
  %746 = vmatpush.msra.mxu0 0.0
  %747 = vmatpush.msra.mxu0 0.0
  %748 = vmatpush.msra.mxu0 0.0
  %749 = vmatpush.msra.mxu0 0.0
  %750 = vmatpush.msra.mxu0 0.0
  %751 = vmatpush.msra.mxu0 0.0
  %752 = vmatpush.msra.mxu0 0.0
  %753 = vmatpush.msra.mxu0 0.0
  %754 = vmatpush.msra.mxu0 0.0
  %755 = vmatpush.msra.mxu0 0.0
  %756 = vmatpush.msra.mxu0 0.0
  %757 = vmatpush.msra.mxu0 0.0
  %758 = vmatpush.msra.mxu0 0.0
  %759 = vmatpush.msra.mxu0 0.0
  %760 = vmatpush.msra.mxu0 %v255
  %761 = vmatpush.msra.mxu0 %v254
  %762 = vmatmul.f32.gmra.mxu0 %v735
  %v763 = vpop.f32.mrf.mxu0
  %v764 = vadd.f32 0.0, %v763
  %765 = vmatmul.f32.gmra.mxu0 %v738
  %v766 = vpop.f32.mrf.mxu0
  %v767 = vadd.f32 0.0, %v766
  %768 = vmatmul.f32.gmra.mxu0 %v741
  %v769 = vpop.f32.mrf.mxu0
  %v770 = vadd.f32 0.0, %v769
  %771 = vmatmul.f32.gmra.mxu0 %v744
  %v772 = vpop.f32.mrf.mxu0
  %v773 = vadd.f32 0.0, %v772
  %774 = vdwg.mxu0
  %v775 = vadd.f32 %v730, %v764
  %v776 = vadd.f32 %v731, %v767
  %v777 = vadd.f32 %v732, %v770
  %v778 = vadd.f32 %v733, %v773
  %v779 = vld [vmem:[%s5] sm:$0x1]
  %v781 = vperm.slane %v779, 0
  %v783 = vadd.f32 %v775, %v781
  %v784 = vadd.f32 %v776, %v781
  %v785 = vadd.f32 %v777, %v781
  %v786 = vadd.f32 %v778, %v781
  %v787 = vmax.f32 %v783, 0.0
  %v788 = vmax.f32 %v784, 0.0
  %v789 = vmax.f32 %v785, 0.0
  %v790 = vmax.f32 %v786, 0.0
  %v791 = vld [vmem:[%s6] sm:$0xff]
  %v792 = vld [vmem:[%s6 + $0x8] sm:$0xff]
  %v793 = vld [vmem:[%s6 + $0x10] sm:$0xff]
  %v794 = vld [vmem:[%s6 + $0x18] sm:$0xff]
  %v795 = vld [vmem:[%s6 + $0x20] sm:$0xff]
  %v796 = vld [vmem:[%s6 + $0x28] sm:$0xff]
  %v797 = vld [vmem:[%s6 + $0x30] sm:$0xff]
  %v798 = vld [vmem:[%s6 + $0x38] sm:$0xff]
  %v799 = vld [vmem:[%s6 + $0x40] sm:$0xff]
  %v800 = vld [vmem:[%s6 + $0x48] sm:$0xff]
  %v801 = vld [vmem:[%s6 + $0x50] sm:$0xff]
  %v802 = vld [vmem:[%s6 + $0x58] sm:$0xff]
  %v803 = vld [vmem:[%s6 + $0x60] sm:$0xff]
  %v804 = vld [vmem:[%s6 + $0x68] sm:$0xff]
  %v805 = vld [vmem:[%s6 + $0x70] sm:$0xff]
  %v806 = vld [vmem:[%s6 + $0x78] sm:$0xff]
  %v807 = vld [vmem:[%s6 + $0x80] sm:$0xff]
  %v808 = vld [vmem:[%s6 + $0x88] sm:$0xff]
  %v809 = vld [vmem:[%s6 + $0x90] sm:$0xff]
  %v810 = vld [vmem:[%s6 + $0x98] sm:$0xff]
  %v811 = vld [vmem:[%s6 + $0xa0] sm:$0xff]
  %v812 = vld [vmem:[%s6 + $0xa8] sm:$0xff]
  %v813 = vld [vmem:[%s6 + $0xb0] sm:$0xff]
  %v814 = vld [vmem:[%s6 + $0xb8] sm:$0xff]
  %v815 = vld [vmem:[%s6 + $0xc0] sm:$0xff]
  %v816 = vld [vmem:[%s6 + $0xc8] sm:$0xff]
  %v817 = vld [vmem:[%s6 + $0xd0] sm:$0xff]
  %v818 = vld [vmem:[%s6 + $0xd8] sm:$0xff]
  %v819 = vld [vmem:[%s6 + $0xe0] sm:$0xff]
  %v820 = vld [vmem:[%s6 + $0xe8] sm:$0xff]
  %v821 = vld [vmem:[%s6 + $0xf0] sm:$0xff]
  %v822 = vld [vmem:[%s6 + $0xf8] sm:$0xff]
  %v823 = vld [vmem:[%s6 + $0x100] sm:$0xff]
  %v824 = vld [vmem:[%s6 + $0x108] sm:$0xff]
  %v825 = vld [vmem:[%s6 + $0x110] sm:$0xff]
  %v826 = vld [vmem:[%s6 + $0x118] sm:$0xff]
  %v827 = vld [vmem:[%s7] sm:$0xff]
  %v828 = vld [vmem:[%s7 + $0x8] sm:$0xff]
  %v829 = vld [vmem:[%s7 + $0x10] sm:$0xff]
  %v830 = vld [vmem:[%s7 + $0x18] sm:$0xff]
  %v831 = vld [vmem:[%s7 + $0x20] sm:$0xff]
  %v832 = vld [vmem:[%s7 + $0x28] sm:$0xff]
  %v833 = vld [vmem:[%s7 + $0x30] sm:$0xff]
  %v834 = vld [vmem:[%s7 + $0x38] sm:$0xff]
  %v835 = vld [vmem:[%s7 + $0x40] sm:$0xff]
  %v836 = vld [vmem:[%s7 + $0x48] sm:$0xff]
  %v837 = vld [vmem:[%s7 + $0x50] sm:$0xff]
  %v838 = vld [vmem:[%s7 + $0x58] sm:$0xff]
  %v839 = vld [vmem:[%s7 + $0x60] sm:$0xff]
  %v840 = vld [vmem:[%s7 + $0x68] sm:$0xff]
  %v841 = vld [vmem:[%s7 + $0x70] sm:$0xff]
  %v842 = vld [vmem:[%s7 + $0x78] sm:$0xff]
  %v843 = vld [vmem:[%s7 + $0x80] sm:$0xff]
  %v844 = vld [vmem:[%s7 + $0x88] sm:$0xff]
  %v845 = vld [vmem:[%s7 + $0x90] sm:$0xff]
  %v846 = vld [vmem:[%s7 + $0x98] sm:$0xff]
  %v847 = vld [vmem:[%s7 + $0xa0] sm:$0xff]
  %v848 = vld [vmem:[%s7 + $0xa8] sm:$0xff]
  %v849 = vld [vmem:[%s7 + $0xb0] sm:$0xff]
  %v850 = vld [vmem:[%s7 + $0xb8] sm:$0xff]
  %v851 = vld [vmem:[%s7 + $0xc0] sm:$0xff]
  %v852 = vld [vmem:[%s7 + $0xc8] sm:$0xff]
  %v853 = vld [vmem:[%s7 + $0xd0] sm:$0xff]
  %v854 = vld [vmem:[%s7 + $0xd8] sm:$0xff]
  %v855 = vld [vmem:[%s7 + $0xe0] sm:$0xff]
  %v856 = vld [vmem:[%s7 + $0xe8] sm:$0xff]
  %v857 = vld [vmem:[%s7 + $0xf0] sm:$0xff]
  %v858 = vld [vmem:[%s7 + $0xf8] sm:$0xff]
  %v859 = vld [vmem:[%s7 + $0x100] sm:$0xff]
  %v860 = vld [vmem:[%s7 + $0x108] sm:$0xff]
  %v861 = vld [vmem:[%s7 + $0x110] sm:$0xff]
  %v862 = vld [vmem:[%s7 + $0x118] sm:$0xff]
  %vm863 = vcmask 261120
  %v865 = vsel %vm863, %v791, 0
  %v868 = vsel %vm863, %v792, 0
  %v871 = vsel %vm863, %v793, 0
  %v874 = vsel %vm863, %v794, 0
  %v877 = vsel %vm863, %v795, 0
  %v880 = vsel %vm863, %v796, 0
  %v883 = vsel %vm863, %v797, 0
  %v886 = vsel %vm863, %v798, 0
  %v889 = vsel %vm863, %v799, 0
  %v892 = vsel %vm863, %v800, 0
  %v895 = vsel %vm863, %v801, 0
  %v898 = vsel %vm863, %v802, 0
  %v901 = vsel %vm863, %v803, 0
  %v904 = vsel %vm863, %v804, 0
  %v907 = vsel %vm863, %v805, 0
  %v910 = vsel %vm863, %v806, 0
  %v913 = vsel %vm863, %v807, 0
  %v916 = vsel %vm863, %v808, 0
  %v919 = vsel %vm863, %v809, 0
  %v922 = vsel %vm863, %v810, 0
  %v925 = vsel %vm863, %v811, 0
  %v928 = vsel %vm863, %v812, 0
  %v931 = vsel %vm863, %v813, 0
  %v934 = vsel %vm863, %v814, 0
  %v937 = vsel %vm863, %v815, 0
  %v940 = vsel %vm863, %v816, 0
  %v943 = vsel %vm863, %v817, 0
  %v946 = vsel %vm863, %v818, 0
  %v949 = vsel %vm863, %v819, 0
  %v952 = vsel %vm863, %v820, 0
  %v955 = vsel %vm863, %v821, 0
  %v958 = vsel %vm863, %v822, 0
  %v961 = vsel %vm863, %v823, 0
  %v964 = vsel %vm863, %v824, 0
  %v967 = vsel %vm863, %v825, 0
  %v970 = vsel %vm863, %v826, 0
  %972 = vmatpush.msra.mxu0 0.0
  %973 = vmatpush.msra.mxu0 0.0
  %974 = vmatpush.msra.mxu0 0.0
  %975 = vmatpush.msra.mxu0 0.0
  %976 = vmatpush.msra.mxu0 0.0
  %977 = vmatpush.msra.mxu0 0.0
  %978 = vmatpush.msra.mxu0 0.0
  %979 = vmatpush.msra.mxu0 0.0
  %980 = vmatpush.msra.mxu0 0.0
  %981 = vmatpush.msra.mxu0 0.0
  %982 = vmatpush.msra.mxu0 0.0
  %983 = vmatpush.msra.mxu0 0.0
  %984 = vmatpush.msra.mxu0 %v790
  %985 = vmatpush.msra.mxu0 %v789
  %986 = vmatpush.msra.mxu0 %v788
  %987 = vmatpush.msra.mxu0 %v787
  %988 = vmatmul.f32.gmra.mxu0 %v865
  %v989 = vpop.f32.mrf.mxu0
  %v990 = vadd.f32 0.0, %v989
  %991 = vmatmul.f32.gmra.mxu0 %v868
  %v992 = vpop.f32.mrf.mxu0
  %v993 = vadd.f32 0.0, %v992
  %994 = vmatmul.f32.gmra.mxu0 %v871
  %v995 = vpop.f32.mrf.mxu0
  %v996 = vadd.f32 0.0, %v995
  %997 = vmatmul.f32.gmra.mxu0 %v874
  %v998 = vpop.f32.mrf.mxu0
  %v999 = vadd.f32 0.0, %v998
  %1000 = vmatmul.f32.gmra.mxu0 %v877
  %v1001 = vpop.f32.mrf.mxu0
  %v1002 = vadd.f32 0.0, %v1001
  %1003 = vmatmul.f32.gmra.mxu0 %v880
  %v1004 = vpop.f32.mrf.mxu0
  %v1005 = vadd.f32 0.0, %v1004
  %1006 = vmatmul.f32.gmra.mxu0 %v883
  %v1007 = vpop.f32.mrf.mxu0
  %v1008 = vadd.f32 0.0, %v1007
  %1009 = vmatmul.f32.gmra.mxu0 %v886
  %v1010 = vpop.f32.mrf.mxu0
  %v1011 = vadd.f32 0.0, %v1010
  %1012 = vmatmul.f32.gmra.mxu0 %v889
  %v1013 = vpop.f32.mrf.mxu0
  %v1014 = vadd.f32 0.0, %v1013
  %1015 = vmatmul.f32.gmra.mxu0 %v892
  %v1016 = vpop.f32.mrf.mxu0
  %v1017 = vadd.f32 0.0, %v1016
  %1018 = vmatmul.f32.gmra.mxu0 %v895
  %v1019 = vpop.f32.mrf.mxu0
  %v1020 = vadd.f32 0.0, %v1019
  %1021 = vmatmul.f32.gmra.mxu0 %v898
  %v1022 = vpop.f32.mrf.mxu0
  %v1023 = vadd.f32 0.0, %v1022
  %1024 = vmatmul.f32.gmra.mxu0 %v901
  %v1025 = vpop.f32.mrf.mxu0
  %v1026 = vadd.f32 0.0, %v1025
  %1027 = vmatmul.f32.gmra.mxu0 %v904
  %v1028 = vpop.f32.mrf.mxu0
  %v1029 = vadd.f32 0.0, %v1028
  %1030 = vmatmul.f32.gmra.mxu0 %v907
  %v1031 = vpop.f32.mrf.mxu0
  %v1032 = vadd.f32 0.0, %v1031
  %1033 = vmatmul.f32.gmra.mxu0 %v910
  %v1034 = vpop.f32.mrf.mxu0
  %v1035 = vadd.f32 0.0, %v1034
  %1036 = vmatmul.f32.gmra.mxu0 %v913
  %v1037 = vpop.f32.mrf.mxu0
  %v1038 = vadd.f32 0.0, %v1037
  %1039 = vmatmul.f32.gmra.mxu0 %v916
  %v1040 = vpop.f32.mrf.mxu0
  %v1041 = vadd.f32 0.0, %v1040
  %1042 = vmatmul.f32.gmra.mxu0 %v919
  %v1043 = vpop.f32.mrf.mxu0
  %v1044 = vadd.f32 0.0, %v1043
  %1045 = vmatmul.f32.gmra.mxu0 %v922
  %v1046 = vpop.f32.mrf.mxu0
  %v1047 = vadd.f32 0.0, %v1046
  %1048 = vmatmul.f32.gmra.mxu0 %v925
  %v1049 = vpop.f32.mrf.mxu0
  %v1050 = vadd.f32 0.0, %v1049
  %1051 = vmatmul.f32.gmra.mxu0 %v928
  %v1052 = vpop.f32.mrf.mxu0
  %v1053 = vadd.f32 0.0, %v1052
  %1054 = vmatmul.f32.gmra.mxu0 %v931
  %v1055 = vpop.f32.mrf.mxu0
  %v1056 = vadd.f32 0.0, %v1055
  %1057 = vmatmul.f32.gmra.mxu0 %v934
  %v1058 = vpop.f32.mrf.mxu0
  %v1059 = vadd.f32 0.0, %v1058
  %1060 = vmatmul.f32.gmra.mxu0 %v937
  %v1061 = vpop.f32.mrf.mxu0
  %v1062 = vadd.f32 0.0, %v1061
  %1063 = vmatmul.f32.gmra.mxu0 %v940
  %v1064 = vpop.f32.mrf.mxu0
  %v1065 = vadd.f32 0.0, %v1064
  %1066 = vmatmul.f32.gmra.mxu0 %v943
  %v1067 = vpop.f32.mrf.mxu0
  %v1068 = vadd.f32 0.0, %v1067
  %1069 = vmatmul.f32.gmra.mxu0 %v946
  %v1070 = vpop.f32.mrf.mxu0
  %v1071 = vadd.f32 0.0, %v1070
  %1072 = vmatmul.f32.gmra.mxu0 %v949
  %v1073 = vpop.f32.mrf.mxu0
  %v1074 = vadd.f32 0.0, %v1073
  %1075 = vmatmul.f32.gmra.mxu0 %v952
  %v1076 = vpop.f32.mrf.mxu0
  %v1077 = vadd.f32 0.0, %v1076
  %1078 = vmatmul.f32.gmra.mxu0 %v955
  %v1079 = vpop.f32.mrf.mxu0
  %v1080 = vadd.f32 0.0, %v1079
  %1081 = vmatmul.f32.gmra.mxu0 %v958
  %v1082 = vpop.f32.mrf.mxu0
  %v1083 = vadd.f32 0.0, %v1082
  %1084 = vmatmul.f32.gmra.mxu0 %v961
  %v1085 = vpop.f32.mrf.mxu0
  %v1086 = vadd.f32 0.0, %v1085
  %1087 = vmatmul.f32.gmra.mxu0 %v964
  %v1088 = vpop.f32.mrf.mxu0
  %v1089 = vadd.f32 0.0, %v1088
  %1090 = vmatmul.f32.gmra.mxu0 %v967
  %v1091 = vpop.f32.mrf.mxu0
  %v1092 = vadd.f32 0.0, %v1091
  %1093 = vmatmul.f32.gmra.mxu0 %v970
  %v1094 = vpop.f32.mrf.mxu0
  %v1095 = vadd.f32 0.0, %v1094
  %1096 = vdwg.mxu0
  %v1098 = vsel %vm863, %v1002, 0
  %v1101 = vsel %vm863, %v1005, 0
  %v1104 = vsel %vm863, %v1008, 0
  %v1107 = vsel %vm863, %v1011, 0
  %1109 = vmatpush.msra.mxu0 0.0
  %1110 = vmatpush.msra.mxu0 0.0
  %1111 = vmatpush.msra.mxu0 0.0
  %1112 = vmatpush.msra.mxu0 0.0
  %1113 = vmatpush.msra.mxu0 0.0
  %1114 = vmatpush.msra.mxu0 0.0
  %1115 = vmatpush.msra.mxu0 0.0
  %1116 = vmatpush.msra.mxu0 0.0
  %1117 = vmatpush.msra.mxu0 0.0
  %1118 = vmatpush.msra.mxu0 0.0
  %1119 = vmatpush.msra.mxu0 0.0
  %1120 = vmatpush.msra.mxu0 0.0
  %1121 = vmatpush.msra.mxu0 %v834
  %1122 = vmatpush.msra.mxu0 %v833
  %1123 = vmatpush.msra.mxu0 %v832
  %1124 = vmatpush.msra.mxu0 %v831
  %1125 = vmatmul.f32.gmra.mxu0 %v1098
  %v1126 = vpop.f32.mrf.mxu0
  %v1127 = vadd.f32 0.0, %v1126
  %1128 = vmatmul.f32.gmra.mxu0 %v1101
  %v1129 = vpop.f32.mrf.mxu0
  %v1130 = vadd.f32 0.0, %v1129
  %1131 = vmatmul.f32.gmra.mxu0 %v1104
  %v1132 = vpop.f32.mrf.mxu0
  %v1133 = vadd.f32 0.0, %v1132
  %1134 = vmatmul.f32.gmra.mxu0 %v1107
  %v1135 = vpop.f32.mrf.mxu0
  %v1136 = vadd.f32 0.0, %v1135
  %1137 = vdwg.mxu0
  %v1139 = vsel %vm863, %v990, 0
  %v1142 = vsel %vm863, %v993, 0
  %v1145 = vsel %vm863, %v996, 0
  %v1148 = vsel %vm863, %v999, 0
  %1150 = vmatpush.msra.mxu0 0.0
  %1151 = vmatpush.msra.mxu0 0.0
  %1152 = vmatpush.msra.mxu0 0.0
  %1153 = vmatpush.msra.mxu0 0.0
  %1154 = vmatpush.msra.mxu0 0.0
  %1155 = vmatpush.msra.mxu0 0.0
  %1156 = vmatpush.msra.mxu0 0.0
  %1157 = vmatpush.msra.mxu0 0.0
  %1158 = vmatpush.msra.mxu0 0.0
  %1159 = vmatpush.msra.mxu0 0.0
  %1160 = vmatpush.msra.mxu0 0.0
  %1161 = vmatpush.msra.mxu0 0.0
  %1162 = vmatpush.msra.mxu0 %v830
  %1163 = vmatpush.msra.mxu0 %v829
  %1164 = vmatpush.msra.mxu0 %v828
  %1165 = vmatpush.msra.mxu0 %v827
  %1166 = vmatmul.f32.gmra.mxu0 %v1139
  %v1167 = vpop.f32.mrf.mxu0
  %v1168 = vadd.f32 %v1127, %v1167
  %1169 = vmatmul.f32.gmra.mxu0 %v1142
  %v1170 = vpop.f32.mrf.mxu0
  %v1171 = vadd.f32 %v1130, %v1170
  %1172 = vmatmul.f32.gmra.mxu0 %v1145
  %v1173 = vpop.f32.mrf.mxu0
  %v1174 = vadd.f32 %v1133, %v1173
  %1175 = vmatmul.f32.gmra.mxu0 %v1148
  %v1176 = vpop.f32.mrf.mxu0
  %v1177 = vadd.f32 %v1136, %v1176
  %1178 = vdwg.mxu0
  %v1180 = vsel %vm863, %v1014, 0
  %v1183 = vsel %vm863, %v1017, 0
  %v1186 = vsel %vm863, %v1020, 0
  %v1189 = vsel %vm863, %v1023, 0
  %1191 = vmatpush.msra.mxu0 0.0
  %1192 = vmatpush.msra.mxu0 0.0
  %1193 = vmatpush.msra.mxu0 0.0
  %1194 = vmatpush.msra.mxu0 0.0
  %1195 = vmatpush.msra.mxu0 0.0
  %1196 = vmatpush.msra.mxu0 0.0
  %1197 = vmatpush.msra.mxu0 0.0
  %1198 = vmatpush.msra.mxu0 0.0
  %1199 = vmatpush.msra.mxu0 0.0
  %1200 = vmatpush.msra.mxu0 0.0
  %1201 = vmatpush.msra.mxu0 0.0
  %1202 = vmatpush.msra.mxu0 0.0
  %1203 = vmatpush.msra.mxu0 %v838
  %1204 = vmatpush.msra.mxu0 %v837
  %1205 = vmatpush.msra.mxu0 %v836
  %1206 = vmatpush.msra.mxu0 %v835
  %1207 = vmatmul.f32.gmra.mxu0 %v1180
  %v1208 = vpop.f32.mrf.mxu0
  %v1209 = vadd.f32 0.0, %v1208
  %1210 = vmatmul.f32.gmra.mxu0 %v1183
  %v1211 = vpop.f32.mrf.mxu0
  %v1212 = vadd.f32 0.0, %v1211
  %1213 = vmatmul.f32.gmra.mxu0 %v1186
  %v1214 = vpop.f32.mrf.mxu0
  %v1215 = vadd.f32 0.0, %v1214
  %1216 = vmatmul.f32.gmra.mxu0 %v1189
  %v1217 = vpop.f32.mrf.mxu0
  %v1218 = vadd.f32 0.0, %v1217
  %1219 = vdwg.mxu0
  %v1220 = vadd.f32 %v1168, %v1209
  %v1221 = vadd.f32 %v1171, %v1212
  %v1222 = vadd.f32 %v1174, %v1215
  %v1223 = vadd.f32 %v1177, %v1218
  %v1225 = vsel %vm863, %v1026, 0
  %v1228 = vsel %vm863, %v1029, 0
  %v1231 = vsel %vm863, %v1032, 0
  %v1234 = vsel %vm863, %v1035, 0
  %1236 = vmatpush.msra.mxu0 0.0
  %1237 = vmatpush.msra.mxu0 0.0
  %1238 = vmatpush.msra.mxu0 0.0
  %1239 = vmatpush.msra.mxu0 0.0
  %1240 = vmatpush.msra.mxu0 0.0
  %1241 = vmatpush.msra.mxu0 0.0
  %1242 = vmatpush.msra.mxu0 0.0
  %1243 = vmatpush.msra.mxu0 0.0
  %1244 = vmatpush.msra.mxu0 0.0
  %1245 = vmatpush.msra.mxu0 0.0
  %1246 = vmatpush.msra.mxu0 0.0
  %1247 = vmatpush.msra.mxu0 0.0
  %1248 = vmatpush.msra.mxu0 %v842
  %1249 = vmatpush.msra.mxu0 %v841
  %1250 = vmatpush.msra.mxu0 %v840
  %1251 = vmatpush.msra.mxu0 %v839
  %1252 = vmatmul.f32.gmra.mxu0 %v1225
  %v1253 = vpop.f32.mrf.mxu0
  %v1254 = vadd.f32 0.0, %v1253
  %1255 = vmatmul.f32.gmra.mxu0 %v1228
  %v1256 = vpop.f32.mrf.mxu0
  %v1257 = vadd.f32 0.0, %v1256
  %1258 = vmatmul.f32.gmra.mxu0 %v1231
  %v1259 = vpop.f32.mrf.mxu0
  %v1260 = vadd.f32 0.0, %v1259
  %1261 = vmatmul.f32.gmra.mxu0 %v1234
  %v1262 = vpop.f32.mrf.mxu0
  %v1263 = vadd.f32 0.0, %v1262
  %1264 = vdwg.mxu0
  %v1265 = vadd.f32 %v1220, %v1254
  %v1266 = vadd.f32 %v1221, %v1257
  %v1267 = vadd.f32 %v1222, %v1260
  %v1268 = vadd.f32 %v1223, %v1263
  %v1270 = vsel %vm863, %v1038, 0
  %v1273 = vsel %vm863, %v1041, 0
  %v1276 = vsel %vm863, %v1044, 0
  %v1279 = vsel %vm863, %v1047, 0
  %1281 = vmatpush.msra.mxu0 0.0
  %1282 = vmatpush.msra.mxu0 0.0
  %1283 = vmatpush.msra.mxu0 0.0
  %1284 = vmatpush.msra.mxu0 0.0
  %1285 = vmatpush.msra.mxu0 0.0
  %1286 = vmatpush.msra.mxu0 0.0
  %1287 = vmatpush.msra.mxu0 0.0
  %1288 = vmatpush.msra.mxu0 0.0
  %1289 = vmatpush.msra.mxu0 0.0
  %1290 = vmatpush.msra.mxu0 0.0
  %1291 = vmatpush.msra.mxu0 0.0
  %1292 = vmatpush.msra.mxu0 0.0
  %1293 = vmatpush.msra.mxu0 %v846
  %1294 = vmatpush.msra.mxu0 %v845
  %1295 = vmatpush.msra.mxu0 %v844
  %1296 = vmatpush.msra.mxu0 %v843
  %1297 = vmatmul.f32.gmra.mxu0 %v1270
  %v1298 = vpop.f32.mrf.mxu0
  %v1299 = vadd.f32 0.0, %v1298
  %1300 = vmatmul.f32.gmra.mxu0 %v1273
  %v1301 = vpop.f32.mrf.mxu0
  %v1302 = vadd.f32 0.0, %v1301
  %1303 = vmatmul.f32.gmra.mxu0 %v1276
  %v1304 = vpop.f32.mrf.mxu0
  %v1305 = vadd.f32 0.0, %v1304
  %1306 = vmatmul.f32.gmra.mxu0 %v1279
  %v1307 = vpop.f32.mrf.mxu0
  %v1308 = vadd.f32 0.0, %v1307
  %1309 = vdwg.mxu0
  %v1310 = vadd.f32 %v1265, %v1299
  %v1311 = vadd.f32 %v1266, %v1302
  %v1312 = vadd.f32 %v1267, %v1305
  %v1313 = vadd.f32 %v1268, %v1308
  %v1315 = vsel %vm863, %v1050, 0
  %v1318 = vsel %vm863, %v1053, 0
  %v1321 = vsel %vm863, %v1056, 0
  %v1324 = vsel %vm863, %v1059, 0
  %1326 = vmatpush.msra.mxu0 0.0
  %1327 = vmatpush.msra.mxu0 0.0
  %1328 = vmatpush.msra.mxu0 0.0
  %1329 = vmatpush.msra.mxu0 0.0
  %1330 = vmatpush.msra.mxu0 0.0
  %1331 = vmatpush.msra.mxu0 0.0
  %1332 = vmatpush.msra.mxu0 0.0
  %1333 = vmatpush.msra.mxu0 0.0
  %1334 = vmatpush.msra.mxu0 0.0
  %1335 = vmatpush.msra.mxu0 0.0
  %1336 = vmatpush.msra.mxu0 0.0
  %1337 = vmatpush.msra.mxu0 0.0
  %1338 = vmatpush.msra.mxu0 %v850
  %1339 = vmatpush.msra.mxu0 %v849
  %1340 = vmatpush.msra.mxu0 %v848
  %1341 = vmatpush.msra.mxu0 %v847
  %1342 = vmatmul.f32.gmra.mxu0 %v1315
  %v1343 = vpop.f32.mrf.mxu0
  %v1344 = vadd.f32 0.0, %v1343
  %1345 = vmatmul.f32.gmra.mxu0 %v1318
  %v1346 = vpop.f32.mrf.mxu0
  %v1347 = vadd.f32 0.0, %v1346
  %1348 = vmatmul.f32.gmra.mxu0 %v1321
  %v1349 = vpop.f32.mrf.mxu0
  %v1350 = vadd.f32 0.0, %v1349
  %1351 = vmatmul.f32.gmra.mxu0 %v1324
  %v1352 = vpop.f32.mrf.mxu0
  %v1353 = vadd.f32 0.0, %v1352
  %1354 = vdwg.mxu0
  %v1355 = vadd.f32 %v1310, %v1344
  %v1356 = vadd.f32 %v1311, %v1347
  %v1357 = vadd.f32 %v1312, %v1350
  %v1358 = vadd.f32 %v1313, %v1353
  %v1360 = vsel %vm863, %v1062, 0
  %v1363 = vsel %vm863, %v1065, 0
  %v1366 = vsel %vm863, %v1068, 0
  %v1369 = vsel %vm863, %v1071, 0
  %1371 = vmatpush.msra.mxu0 0.0
  %1372 = vmatpush.msra.mxu0 0.0
  %1373 = vmatpush.msra.mxu0 0.0
  %1374 = vmatpush.msra.mxu0 0.0
  %1375 = vmatpush.msra.mxu0 0.0
  %1376 = vmatpush.msra.mxu0 0.0
  %1377 = vmatpush.msra.mxu0 0.0
  %1378 = vmatpush.msra.mxu0 0.0
  %1379 = vmatpush.msra.mxu0 0.0
  %1380 = vmatpush.msra.mxu0 0.0
  %1381 = vmatpush.msra.mxu0 0.0
  %1382 = vmatpush.msra.mxu0 0.0
  %1383 = vmatpush.msra.mxu0 %v854
  %1384 = vmatpush.msra.mxu0 %v853
  %1385 = vmatpush.msra.mxu0 %v852
  %1386 = vmatpush.msra.mxu0 %v851
  %1387 = vmatmul.f32.gmra.mxu0 %v1360
  %v1388 = vpop.f32.mrf.mxu0
  %v1389 = vadd.f32 0.0, %v1388
  %1390 = vmatmul.f32.gmra.mxu0 %v1363
  %v1391 = vpop.f32.mrf.mxu0
  %v1392 = vadd.f32 0.0, %v1391
  %1393 = vmatmul.f32.gmra.mxu0 %v1366
  %v1394 = vpop.f32.mrf.mxu0
  %v1395 = vadd.f32 0.0, %v1394
  %1396 = vmatmul.f32.gmra.mxu0 %v1369
  %v1397 = vpop.f32.mrf.mxu0
  %v1398 = vadd.f32 0.0, %v1397
  %1399 = vdwg.mxu0
  %v1400 = vadd.f32 %v1355, %v1389
  %v1401 = vadd.f32 %v1356, %v1392
  %v1402 = vadd.f32 %v1357, %v1395
  %v1403 = vadd.f32 %v1358, %v1398
  %v1405 = vsel %vm863, %v1074, 0
  %v1408 = vsel %vm863, %v1077, 0
  %v1411 = vsel %vm863, %v1080, 0
  %v1414 = vsel %vm863, %v1083, 0
  %1416 = vmatpush.msra.mxu0 0.0
  %1417 = vmatpush.msra.mxu0 0.0
  %1418 = vmatpush.msra.mxu0 0.0
  %1419 = vmatpush.msra.mxu0 0.0
  %1420 = vmatpush.msra.mxu0 0.0
  %1421 = vmatpush.msra.mxu0 0.0
  %1422 = vmatpush.msra.mxu0 0.0
  %1423 = vmatpush.msra.mxu0 0.0
  %1424 = vmatpush.msra.mxu0 0.0
  %1425 = vmatpush.msra.mxu0 0.0
  %1426 = vmatpush.msra.mxu0 0.0
  %1427 = vmatpush.msra.mxu0 0.0
  %1428 = vmatpush.msra.mxu0 %v858
  %1429 = vmatpush.msra.mxu0 %v857
  %1430 = vmatpush.msra.mxu0 %v856
  %1431 = vmatpush.msra.mxu0 %v855
  %1432 = vmatmul.f32.gmra.mxu0 %v1405
  %v1433 = vpop.f32.mrf.mxu0
  %v1434 = vadd.f32 0.0, %v1433
  %1435 = vmatmul.f32.gmra.mxu0 %v1408
  %v1436 = vpop.f32.mrf.mxu0
  %v1437 = vadd.f32 0.0, %v1436
  %1438 = vmatmul.f32.gmra.mxu0 %v1411
  %v1439 = vpop.f32.mrf.mxu0
  %v1440 = vadd.f32 0.0, %v1439
  %1441 = vmatmul.f32.gmra.mxu0 %v1414
  %v1442 = vpop.f32.mrf.mxu0
  %v1443 = vadd.f32 0.0, %v1442
  %1444 = vdwg.mxu0
  %v1445 = vadd.f32 %v1400, %v1434
  %v1446 = vadd.f32 %v1401, %v1437
  %v1447 = vadd.f32 %v1402, %v1440
  %v1448 = vadd.f32 %v1403, %v1443
  %v1450 = vsel %vm863, %v1086, 0
  %v1453 = vsel %vm863, %v1089, 0
  %v1456 = vsel %vm863, %v1092, 0
  %v1459 = vsel %vm863, %v1095, 0
  %1461 = vmatpush.msra.mxu0 0.0
  %1462 = vmatpush.msra.mxu0 0.0
  %1463 = vmatpush.msra.mxu0 0.0
  %1464 = vmatpush.msra.mxu0 0.0
  %1465 = vmatpush.msra.mxu0 0.0
  %1466 = vmatpush.msra.mxu0 0.0
  %1467 = vmatpush.msra.mxu0 0.0
  %1468 = vmatpush.msra.mxu0 0.0
  %1469 = vmatpush.msra.mxu0 0.0
  %1470 = vmatpush.msra.mxu0 0.0
  %1471 = vmatpush.msra.mxu0 0.0
  %1472 = vmatpush.msra.mxu0 0.0
  %1473 = vmatpush.msra.mxu0 %v862
  %1474 = vmatpush.msra.mxu0 %v861
  %1475 = vmatpush.msra.mxu0 %v860
  %1476 = vmatpush.msra.mxu0 %v859
  %1477 = vmatmul.f32.gmra.mxu0 %v1450
  %v1478 = vpop.f32.mrf.mxu0
  %v1479 = vadd.f32 0.0, %v1478
  %1480 = vmatmul.f32.gmra.mxu0 %v1453
  %v1481 = vpop.f32.mrf.mxu0
  %v1482 = vadd.f32 0.0, %v1481
  %1483 = vmatmul.f32.gmra.mxu0 %v1456
  %v1484 = vpop.f32.mrf.mxu0
  %v1485 = vadd.f32 0.0, %v1484
  %1486 = vmatmul.f32.gmra.mxu0 %v1459
  %v1487 = vpop.f32.mrf.mxu0
  %v1488 = vadd.f32 0.0, %v1487
  %1489 = vdwg.mxu0
  %v1490 = vadd.f32 %v1445, %v1479
  %v1491 = vadd.f32 %v1446, %v1482
  %v1492 = vadd.f32 %v1447, %v1485
  %v1493 = vadd.f32 %v1448, %v1488
  %v1494 = vld [vmem:[%s8] sm:$0x1]
  %v1496 = vperm.slane %v1494, 0
  %v1498 = vadd.f32 %v1490, %v1496
  %v1499 = vadd.f32 %v1491, %v1496
  %v1500 = vadd.f32 %v1492, %v1496
  %v1501 = vadd.f32 %v1493, %v1496
  %v1502 = vmax.f32 %v1498, 0.0
  %v1503 = vmax.f32 %v1499, 0.0
  %v1504 = vmax.f32 %v1500, 0.0
  %v1505 = vmax.f32 %v1501, 0.0
  %v1506 = vld [vmem:[%s9] sm:$0xff]
  %v1507 = vld [vmem:[%s9 + $0x8] sm:$0xff]
  %v1508 = vld [vmem:[%s9 + $0x10] sm:$0xff]
  %v1509 = vld [vmem:[%s9 + $0x18] sm:$0xff]
  %v1510 = vld [vmem:[%s9 + $0x20] sm:$0xff]
  %v1511 = vld [vmem:[%s9 + $0x28] sm:$0xff]
  %v1512 = vld [vmem:[%s9 + $0x30] sm:$0xff]
  %v1513 = vld [vmem:[%s9 + $0x38] sm:$0xff]
  %v1514 = vld [vmem:[%s9 + $0x40] sm:$0xff]
  %v1515 = vld [vmem:[%s10] sm:$0xff]
  %v1516 = vld [vmem:[%s10 + $0x8] sm:$0xff]
  %v1517 = vld [vmem:[%s10 + $0x10] sm:$0xff]
  %v1518 = vld [vmem:[%s10 + $0x18] sm:$0xff]
  %v1519 = vld [vmem:[%s10 + $0x20] sm:$0xff]
  %v1520 = vld [vmem:[%s10 + $0x28] sm:$0xff]
  %v1521 = vld [vmem:[%s10 + $0x30] sm:$0xff]
  %v1522 = vld [vmem:[%s10 + $0x38] sm:$0xff]
  %v1523 = vld [vmem:[%s10 + $0x40] sm:$0xff]
  %v1525 = vsel %vm863, %v1506, 0
  %v1528 = vsel %vm863, %v1507, 0
  %v1531 = vsel %vm863, %v1508, 0
  %v1534 = vsel %vm863, %v1509, 0
  %v1537 = vsel %vm863, %v1510, 0
  %v1540 = vsel %vm863, %v1511, 0
  %v1543 = vsel %vm863, %v1512, 0
  %v1546 = vsel %vm863, %v1513, 0
  %v1549 = vsel %vm863, %v1514, 0
  %1551 = vmatpush.msra.mxu0 0.0
  %1552 = vmatpush.msra.mxu0 0.0
  %1553 = vmatpush.msra.mxu0 0.0
  %1554 = vmatpush.msra.mxu0 0.0
  %1555 = vmatpush.msra.mxu0 0.0
  %1556 = vmatpush.msra.mxu0 0.0
  %1557 = vmatpush.msra.mxu0 0.0
  %1558 = vmatpush.msra.mxu0 0.0
  %1559 = vmatpush.msra.mxu0 0.0
  %1560 = vmatpush.msra.mxu0 0.0
  %1561 = vmatpush.msra.mxu0 0.0
  %1562 = vmatpush.msra.mxu0 0.0
  %1563 = vmatpush.msra.mxu0 %v1505
  %1564 = vmatpush.msra.mxu0 %v1504
  %1565 = vmatpush.msra.mxu0 %v1503
  %1566 = vmatpush.msra.mxu0 %v1502
  %1567 = vmatmul.f32.gmra.mxu0 %v1525
  %v1568 = vpop.f32.mrf.mxu0
  %v1569 = vadd.f32 0.0, %v1568
  %1570 = vmatmul.f32.gmra.mxu0 %v1528
  %v1571 = vpop.f32.mrf.mxu0
  %v1572 = vadd.f32 0.0, %v1571
  %1573 = vmatmul.f32.gmra.mxu0 %v1531
  %v1574 = vpop.f32.mrf.mxu0
  %v1575 = vadd.f32 0.0, %v1574
  %1576 = vmatmul.f32.gmra.mxu0 %v1534
  %v1577 = vpop.f32.mrf.mxu0
  %v1578 = vadd.f32 0.0, %v1577
  %1579 = vmatmul.f32.gmra.mxu0 %v1537
  %v1580 = vpop.f32.mrf.mxu0
  %v1581 = vadd.f32 0.0, %v1580
  %1582 = vmatmul.f32.gmra.mxu0 %v1540
  %v1583 = vpop.f32.mrf.mxu0
  %v1584 = vadd.f32 0.0, %v1583
  %1585 = vmatmul.f32.gmra.mxu0 %v1543
  %v1586 = vpop.f32.mrf.mxu0
  %v1587 = vadd.f32 0.0, %v1586
  %1588 = vmatmul.f32.gmra.mxu0 %v1546
  %v1589 = vpop.f32.mrf.mxu0
  %v1590 = vadd.f32 0.0, %v1589
  %1591 = vmatmul.f32.gmra.mxu0 %v1549
  %v1592 = vpop.f32.mrf.mxu0
  %v1593 = vadd.f32 0.0, %v1592
  %1594 = vdwg.mxu0
  %v1595 = vmul.f32 %v1569, %v1515
  %v1596 = vmul.f32 %v1572, %v1516
  %v1597 = vmul.f32 %v1575, %v1517
  %v1598 = vmul.f32 %v1578, %v1518
  %v1599 = vmul.f32 %v1581, %v1519
  %v1600 = vmul.f32 %v1584, %v1520
  %v1601 = vmul.f32 %v1587, %v1521
  %v1602 = vmul.f32 %v1590, %v1522
  %v1603 = vmul.f32 %v1593, %v1523
  %v1604 = vsel %vm381, %v1595, 0.0
  %1605 = vadd.xlane.f32.xlu0 %v1604
  %v1606 = vpop.xlane.xlu0 %1605
  %v1607 = vsel %vm381, %v1596, 0.0
  %1608 = vadd.xlane.f32.xlu0 %v1607
  %v1609 = vpop.xlane.xlu0 %1608
  %v1610 = vsel %vm381, %v1597, 0.0
  %1611 = vadd.xlane.f32.xlu0 %v1610
  %v1612 = vpop.xlane.xlu0 %1611
  %v1613 = vsel %vm381, %v1598, 0.0
  %1614 = vadd.xlane.f32.xlu0 %v1613
  %v1615 = vpop.xlane.xlu0 %1614
  %v1616 = vsel %vm381, %v1599, 0.0
  %1617 = vadd.xlane.f32.xlu0 %v1616
  %v1618 = vpop.xlane.xlu0 %1617
  %v1619 = vsel %vm381, %v1600, 0.0
  %1620 = vadd.xlane.f32.xlu0 %v1619
  %v1621 = vpop.xlane.xlu0 %1620
  %v1622 = vsel %vm381, %v1601, 0.0
  %1623 = vadd.xlane.f32.xlu0 %v1622
  %v1624 = vpop.xlane.xlu0 %1623
  %v1625 = vsel %vm381, %v1602, 0.0
  %1626 = vadd.xlane.f32.xlu0 %v1625
  %v1627 = vpop.xlane.xlu0 %1626
  %v1628 = vsel %vm381, %v1603, 0.0
  %1629 = vadd.xlane.f32.xlu0 %v1628
  %v1630 = vpop.xlane.xlu0 %1629
  %v1631 = vadd.f32 %v1606, 0.0
  %v1632 = vadd.f32 %v1631, %v1609
  %v1633 = vadd.f32 %v1632, %v1612
  %v1634 = vadd.f32 %v1633, %v1615
  %v1635 = vadd.f32 %v1634, %v1618
  %v1636 = vadd.f32 %v1635, %v1621
  %v1637 = vadd.f32 %v1636, %v1624
  %v1638 = vadd.f32 %v1637, %v1627
  %v1639 = vadd.f32 %v1638, %v1630
  %v1640 = vld [vmem:[#allocation2] sm:$0x1]
  %v1642 = vperm.slane %v1640, 0
  %v1644 = vadd.f32 %v1639, %v1642
  %v1645 = vmul.f32 %v1644, 10.0
  %v1646 = vsub.f32 %v1645, 5.0
  %v1647 = vxor.u32 %v1646, 2147483648
  %v1648 = vmul.f32 %v1647, 1.442695
  %v1649 = vpow.pop %v1648
  %v1650 = vadd.f32 %v1649, 1.0
  %v1651 = vrcp.pop %v1650
  %v1652 = vmul.f32 %v1650, %v1651
  %v1653 = vsub.f32 1.0, %v1652
  %v1654 = vmul.f32 %v1651, %v1653
  %v1655 = vadd.f32 %v1651, %v1654
  %vm1656 = vweird.f32 %v1650
  %vm1657 = vweird.f32 %v1651
  %vm1658 = vmor %vm1656, %vm1657
  %v1659 = vsel %vm1658, %v1651, %v1655
  %v1660 = vand.u32 2147483647, %v1650
  %vm1661 = vcmp.eq.f32.partialorder %v1660, 8.507059e+37
  %v1662 = vand.u32 %v1650, 2147483648
  %v1663 = vor.u32 1.1754944e-38, %v1662
  %v1664 = vsel %vm1661, %v1663, %v1659
  %v1665 = vmul.f32 1.0, %v1664
  %v1666 = vmul.f32 %v1665, 4.0
  %v1667 = vsub.f32 1.0, %v1665
  %v1668 = vmul.f32 %v1666, %v1667
  %v1669 = vadd.f32 %v1668, 0.0
  %v1670 = vsub.f32 %v1645, 15.0
  %v1671 = vxor.u32 %v1670, 2147483648
  %v1672 = vmul.f32 %v1671, 1.442695
  %v1673 = vpow.pop %v1672
  %v1674 = vadd.f32 %v1673, 1.0
  %v1675 = vrcp.pop %v1674
  %v1676 = vmul.f32 %v1674, %v1675
  %v1677 = vsub.f32 1.0, %v1676
  %v1678 = vmul.f32 %v1675, %v1677
  %v1679 = vadd.f32 %v1675, %v1678
  %vm1680 = vweird.f32 %v1674
  %vm1681 = vweird.f32 %v1675
  %vm1682 = vmor %vm1680, %vm1681
  %v1683 = vsel %vm1682, %v1675, %v1679
  %v1684 = vand.u32 2147483647, %v1674
  %vm1685 = vcmp.eq.f32.partialorder %v1684, 8.507059e+37
  %v1686 = vand.u32 %v1674, 2147483648
  %v1687 = vor.u32 1.1754944e-38, %v1686
  %v1688 = vsel %vm1685, %v1687, %v1683
  %v1689 = vmul.f32 1.0, %v1688
  %v1690 = vmul.f32 %v1689, 8.0
  %v1691 = vsub.f32 1.0, %v1689
  %v1692 = vmul.f32 %v1690, %v1691
  %v1693 = vadd.f32 %v1669, %v1692
  %v1694 = vsub.f32 %v1645, 25.0
  %v1695 = vxor.u32 %v1694, 2147483648
  %v1696 = vmul.f32 %v1695, 1.442695
  %v1697 = vpow.pop %v1696
  %v1698 = vadd.f32 %v1697, 1.0
  %v1699 = vrcp.pop %v1698
  %v1700 = vmul.f32 %v1698, %v1699
  %v1701 = vsub.f32 1.0, %v1700
  %v1702 = vmul.f32 %v1699, %v1701
  %v1703 = vadd.f32 %v1699, %v1702
  %vm1704 = vweird.f32 %v1698
  %vm1705 = vweird.f32 %v1699
  %vm1706 = vmor %vm1704, %vm1705
  %v1707 = vsel %vm1706, %v1699, %v1703
  %v1708 = vand.u32 2147483647, %v1698
  %vm1709 = vcmp.eq.f32.partialorder %v1708, 8.507059e+37
  %v1710 = vand.u32 %v1698, 2147483648
  %v1711 = vor.u32 1.1754944e-38, %v1710
  %v1712 = vsel %vm1709, %v1711, %v1707
  %v1713 = vmul.f32 1.0, %v1712
  %v1714 = vmul.f32 %v1713, 12.0
  %v1715 = vsub.f32 1.0, %v1713
  %v1716 = vmul.f32 %v1714, %v1715
  %v1717 = vadd.f32 %v1693, %v1716
  %vm1718 = vcmask 7168
  %1719 = vst.msk [vmem:[%s12] sm:$0xff] %vm1718, %v1717
  // Predicated region
  $region50: #{tpu_custom_call.1} parent=0 // pred_check
    _
  $region51: #{tpu_custom_call.1} parent=0 // pred_check_branch
    %1721 = sbr.rel (0) target = $region53
  $region52: #{tpu_custom_call.1} parent=0 // pred_region
    _
  $region53: #{tpu_custom_call.1} parent=0 // pred_fallthru
    _
  // Predicated region
  $region54: #{tpu_custom_call.1} parent=0 // pred_check
    _
  $region55: #{tpu_custom_call.1} parent=0 // pred_check_branch
    %1723 = sbr.rel (0) target = $region57
  $region56: #{tpu_custom_call.1} parent=0 // pred_region
    _
  $region57: #{tpu_custom_call.1} parent=0 // pred_fallthru
    _

</llo_original>
